<compile_context>
chip_gen: v7x
topology: tpu7x:2x2x1
jax: 0.10.0
libtpu: 0.0.40
codegen_flags: <defaults>
</compile_context>

<pallas_src>
import functools
import math

import jax
import jax.numpy as jnp
from jax import lax
from jax.experimental import pallas as pl
from jax.experimental.pallas import tpu as pltpu


def _round_up(x, m):
    return ((x + m - 1) // m) * m


def _prefer_bf16_eup():
    """bf16 VPU/EUP exists on v6e/v7x; v5e (and older) keep the f32 SiLU path."""
    try:
        kind = jax.devices()[0].device_kind.lower()
    except Exception:
        return False
    return ("v6" in kind) or ("v7" in kind)


def _vmem_limit(double_buffered_bytes, resident_bytes):
    need = 2 * double_buffered_bytes + resident_bytes
    return int(min(64 << 20, max(16 << 20, 2 * need)))


# ---------------------------------------------------------------------------
# Shared wrapper-side prep: pad / phase-decompose input, reorder weights for the
# K-concatenated (9*Cin_p) matmul layout.
# ---------------------------------------------------------------------------
def _prepare_conv_inputs(x, w_oihw, b, stride):
    N, Cin, H, W = x.shape
    Cout = w_oihw.shape[0]
    assert w_oihw.shape == (Cout, Cin, 3, 3)
    assert H % stride == 0 and W % stride == 0
    Ho = (H + 2 - 3) // stride + 1
    Wo = (W + 2 - 3) // stride + 1

    # Pad channels to a bf16-sublane-aligned count so the in-kernel scratch copies land on
    # native (16,128) bf16 tile boundaries; zero channels x zero weights contribute nothing.
    cin_p = _round_up(Cin, 16)
    # TODO(synk): fold this pad/cast/phase relayout into the DMA path (pre-zeroed VMEM
    # scratch) instead of an extra XLA pass over the activation.
    xp = jnp.pad(x, ((0, 0), (0, cin_p - Cin), (1, 1), (1, 1))).astype(jnp.bfloat16)
    if stride == 1:
        phases = xp[:, None]                                         # [N, 1, Cin_p, H+2, W+2]
    else:
        # (row-parity, col-parity) phase decomposition: pure relayout, turns stride-2 taps
        # into unit-stride slices inside the kernel.
        phases = jnp.stack(
            [xp[:, :, pr::stride, pc::stride]
             for pr in range(stride) for pc in range(stride)], axis=1)
    n_phase = phases.shape[1]
    Hph, Wph = phases.shape[-2], phases.shape[-1]
    m_out = Ho * Wph                       # valid flat output columns (Wph-padded width)
    m_pad = _round_up(m_out, 128)          # lane-dense output width -> unmasked stores

    # Per-tap (phase index, flat element offset) for k = dy*3 + dx.
    taps = []
    for dy in range(3):
        for dx in range(3):
            ph = (dy % stride) * stride + (dx % stride)
            off = (dy // stride) * Wph + (dx // stride)
            taps.append((ph, off))

    l_raw = Hph * Wph
    extra = max(off + m_pad for _, off in taps) - l_raw     # tail pad keeps slices in-bounds
    xflat = phases.reshape(N, n_phase, cin_p, l_raw)
    if extra > 0:
        xflat = jnp.pad(xflat, ((0, 0), (0, 0), (0, 0), (0, extra)))
    Lp = xflat.shape[-1]

    # Weight layout matches the scratch K order: tap k = dy*3+dx outer, channel inner.
    w_mat = jnp.transpose(w_oihw, (0, 2, 3, 1))                       # [Cout, 3, 3, Cin]
    w_mat = jnp.pad(w_mat, ((0, 0), (0, 0), (0, 0), (0, cin_p - Cin)))
    w_mat = w_mat.reshape(Cout, 9 * cin_p).astype(jnp.bfloat16)
    b_col = b.reshape(Cout, 1).astype(jnp.float32)

    meta = dict(N=N, Cout=Cout, cin_p=cin_p, n_phase=n_phase, Lp=Lp, Hph=Hph, Wph=Wph,
                Ho=Ho, Wo=Wo, m_out=m_out, m_pad=m_pad, taps=tuple(taps))
    return xflat, w_mat, b_col, meta


def _gather_taps_and_matmul(x_ref, w_ref, rhs_ref, *, taps, cin_p, m_pad):
    """Copy the 9 shifted windows into the K-concatenated scratch (vld/vst only, aligned
    destinations), then issue ONE MXU matmul with K = 9*cin_p."""
    for k, (ph, off) in enumerate(taps):
        rhs_ref[k * cin_p:(k + 1) * cin_p, :] = x_ref[0, ph, :, off:off + m_pad]
    return jnp.dot(w_ref[...], rhs_ref[...], preferred_element_type=jnp.float32)


# ---------------------------------------------------------------------------
# Kernel 1: 3x3 conv (+bias, optional SiLU) -> activation output
# ---------------------------------------------------------------------------
def _conv3x3_act_kernel(x_ref, w_ref, b_ref, o_ref, rhs_ref, *,
                        taps, cin_p, m_pad, apply_silu, silu_bf16):
    acc = _gather_taps_and_matmul(x_ref, w_ref, rhs_ref,
                                  taps=taps, cin_p=cin_p, m_pad=m_pad)
    acc = acc + b_ref[...]                                  # f32 bias add
    if apply_silu:
        if silu_bf16:                                       # v6e/v7x: bf16 EUP/VPU
            a = acc.astype(jnp.bfloat16)
            acc = a * jax.nn.sigmoid(a)
        else:                                               # v5e and older: f32 path
            acc = acc * jax.nn.sigmoid(acc)
    o_ref[0] = acc.astype(o_ref.dtype)


def conv3x3_pallas(x, w_oihw, b, *, stride, apply_silu, out_dtype=jnp.bfloat16):
    """PyTorch-style Conv2d(kernel=3, padding=1, stride=stride) on NCHW input via Pallas."""
    xflat, w_mat, b_col, mt = _prepare_conv_inputs(x, w_oihw, b, stride)
    N, Cout = mt["N"], mt["Cout"]
    cin_p, n_phase, Lp, m_pad = mt["cin_p"], mt["n_phase"], mt["Lp"], mt["m_pad"]

    silu_bf16 = apply_silu and _prefer_bf16_eup()
    kern = functools.partial(_conv3x3_act_kernel, taps=mt["taps"], cin_p=cin_p,
                             m_pad=m_pad, apply_silu=apply_silu, silu_bf16=silu_bf16)

    in_block = n_phase * cin_p * Lp * 2
    out_block = Cout * m_pad * jnp.dtype(out_dtype).itemsize
    resident = (w_mat.size * 2 + b_col.size * 4
                + 9 * cin_p * m_pad * 2          # K-concat scratch
                + 4 * Cout * m_pad * 4)          # f32 acc / epilogue temps (headroom)
    cost = pl.CostEstimate(
        flops=2 * N * (9 * cin_p) * Cout * m_pad,
        transcendentals=(N * Cout * m_pad) if apply_silu else 0,
        bytes_accessed=xflat.size * 2 + w_mat.size * 2 + b_col.size * 4 + N * out_block)

    out = pl.pallas_call(
        kern,
        out_shape=jax.ShapeDtypeStruct((N, Cout, m_pad), out_dtype),
        grid=(N,),
        in_specs=[
            pl.BlockSpec((1, n_phase, cin_p, Lp), lambda n: (n, 0, 0, 0)),  # one image / step
            pl.BlockSpec((Cout, 9 * cin_p), lambda n: (0, 0)),              # weights resident
            pl.BlockSpec((Cout, 1), lambda n: (0, 0)),                      # bias resident
        ],
        out_specs=pl.BlockSpec((1, Cout, m_pad), lambda n: (n, 0, 0)),
        scratch_shapes=[pltpu.VMEM((9 * cin_p, m_pad), jnp.bfloat16)],
        compiler_params=pltpu.CompilerParams(
            dimension_semantics=("parallel",),
            vmem_limit_bytes=_vmem_limit(in_block + out_block, resident)),
        cost_estimate=cost,
    )(xflat, w_mat, b_col)
    # TODO(synk): for large spatial extents add a second 'parallel' grid axis over haloed
    # row slabs (manual DMA) so per-block VMEM fits v7x's 32 MiB scoped budget, and fuse
    # conv_in+SiLU+down per slab so the hidden activation never hits HBM.
    out = out[:, :, :mt["m_out"]].reshape(N, Cout, mt["Ho"], mt["Wph"])
    return out[:, :, :, :mt["Wo"]]                            # drop padded-width garbage cols


# ---------------------------------------------------------------------------
# Kernel 2: final 3x3 conv fused with the DiagonalGaussian KL (pred never hits HBM)
# ---------------------------------------------------------------------------
def _conv3x3_kl_kernel(x_ref, w_ref, b_ref, post_ref, kl_ref, rhs_ref, *,
                       taps, cin_p, m_pad, m_out, wph, wo, z):
    acc = _gather_taps_and_matmul(x_ref, w_ref, rhs_ref,
                                  taps=taps, cin_p=cin_p, m_pad=m_pad)
    acc = acc + b_ref[...]                                   # pred params [2Z, m_pad], f32
    m2 = acc[:z]
    lv2 = jnp.clip(acc[z:], -30.0, 20.0)
    m1 = post_ref[0, :z]
    lv1 = jnp.clip(post_ref[0, z:], -30.0, 20.0)
    d = m1 - m2
    # divide-free: 1/var2 = exp(-lv2), var1/var2 = exp(lv1 - lv2)
    term = d * d * jnp.exp(-lv2) + jnp.exp(lv1 - lv2) - 1.0 - lv1 + lv2
    # Mask the padded-width and lane-padding garbage columns.
    col = lax.broadcasted_iota(jnp.int32, term.shape, 1)
    valid = (col < m_out) & ((col % wph) < wo)
    kl_ref[0] = 0.5 * jnp.sum(jnp.where(valid, term, 0.0), keepdims=True)


def conv3x3_kl_pallas(x, w_oihw, b, posterior_params):
    """conv_out (stride 1, no activation) + KL(posterior || DiagGaussian(pred)) per image."""
    xflat, w_mat, b_col, mt = _prepare_conv_inputs(x, w_oihw, b, 1)
    N, Cout = mt["N"], mt["Cout"]
    z = Cout // 2
    cin_p, n_phase, Lp = mt["cin_p"], mt["n_phase"], mt["Lp"]
    Ho, Wo, Wph, m_out, m_pad = mt["Ho"], mt["Wo"], mt["Wph"], mt["m_out"], mt["m_pad"]

    # Relayout the (tiny) given posterior into the same Wph-padded flat layout as pred.
    B, C2, Hl, Wl = posterior_params.shape
    assert (B, C2, Hl, Wl) == (N, Cout, Ho, Wo)
    post = jnp.pad(posterior_params.astype(jnp.float32),
                   ((0, 0), (0, 0), (0, 0), (0, Wph - Wo))).reshape(N, Cout, m_out)
    post = jnp.pad(post, ((0, 0), (0, 0), (0, m_pad - m_out)))

    kern = functools.partial(_conv3x3_kl_kernel, taps=mt["taps"], cin_p=cin_p,
                             m_pad=m_pad, m_out=m_out, wph=Wph, wo=Wo, z=z)

    in_block = n_phase * cin_p * Lp * 2 + Cout * m_pad * 4 + 8   # xflat + posterior + kl out
    resident = (w_mat.size * 2 + b_col.size * 4
                + 9 * cin_p * m_pad * 2 + 8 * Cout * m_pad * 4)
    cost = pl.CostEstimate(
        flops=2 * N * (9 * cin_p) * Cout * m_pad + 12 * N * z * m_pad,
        transcendentals=2 * N * z * m_pad,
        bytes_accessed=xflat.size * 2 + w_mat.size * 2 + b_col.size * 4 + post.size * 4 + N * 4)

    kl = pl.pallas_call(
        kern,
        out_shape=jax.ShapeDtypeStruct((N, 1, 1), jnp.float32),
        grid=(N,),
        in_specs=[
            pl.BlockSpec((1, n_phase, cin_p, Lp), lambda n: (n, 0, 0, 0)),
            pl.BlockSpec((Cout, 9 * cin_p), lambda n: (0, 0)),
            pl.BlockSpec((Cout, 1), lambda n: (0, 0)),
            pl.BlockSpec((1, Cout, m_pad), lambda n: (n, 0, 0)),
        ],
        out_specs=pl.BlockSpec((1, 1, 1), lambda n: (n, 0, 0)),
        scratch_shapes=[pltpu.VMEM((9 * cin_p, m_pad), jnp.bfloat16)],
        compiler_params=pltpu.CompilerParams(
            dimension_semantics=("parallel",),
            vmem_limit_bytes=_vmem_limit(in_block, resident)),
        cost_estimate=cost,
    )(xflat, w_mat, b_col, post)
    return kl.reshape(N)                                     # per-image 0.5 * sum(term)


# ---------------------------------------------------------------------------
# Synthetic frozen encoder + EncoderLoss forward
# ---------------------------------------------------------------------------
# TODO(synk): the real encoder comes from an external yaml config + .pth checkpoint
# (ResNet blocks / GroupNorm / attention) which cannot be loaded here; a small deterministic
# conv encoder (conv3x3 -> SiLU -> conv3x3/s2 -> SiLU -> conv3x3 -> 2*z channels) stands in.
def init_encoder_params(key, c_in=3, hidden=32, z_channels=4):
    def conv_init(k, cin, cout, ksz):
        wk, bk = jax.random.split(k)
        fan_in = cin * ksz * ksz
        w = jax.random.normal(wk, (cout, cin, ksz, ksz), jnp.float32) / math.sqrt(fan_in)
        b = 0.01 * jax.random.normal(bk, (cout,), jnp.float32)
        return w, b

    k1, k2, k3 = jax.random.split(key, 3)
    return {
        "conv_in":  conv_init(k1, c_in, hidden, 3),            # 3x3, stride 1
        "down":     conv_init(k2, hidden, hidden, 3),          # 3x3, stride 2
        "conv_out": conv_init(k3, hidden, 2 * z_channels, 3),  # 3x3, stride 1 -> 2*z channels
    }


def encoder_loss_kl(posterior_params, gt, enc_params, loss_weight=1.0):
    """posterior_params: [B, 2*Z, Hl, Wl] (mean|logvar of the given posterior); gt: [B,C,H,W]."""
    w, b = enc_params["conv_in"]
    x = conv3x3_pallas(gt, w, b, stride=1, apply_silu=True)
    w, b = enc_params["down"]
    x = conv3x3_pallas(x, w, b, stride=2, apply_silu=True)
    w, b = enc_params["conv_out"]
    kl_per_image = conv3x3_kl_pallas(x, w, b, posterior_params)   # [B]
    return loss_weight * jnp.sum(kl_per_image) / posterior_params.shape[0]


# ---------------------------------------------------------------------------
# Pure-JAX reference (same bf16 operand rounding / SiLU dtype) for a correctness check
# ---------------------------------------------------------------------------
def _reference_loss(posterior_params, gt, params, loss_weight):
    silu_bf16 = _prefer_bf16_eup()

    def conv(x, w, b, stride, silu, out_dtype):
        y = lax.conv_general_dilated(
            x.astype(jnp.bfloat16), w.astype(jnp.bfloat16),
            window_strides=(stride, stride), padding=((1, 1), (1, 1)),
            dimension_numbers=("NCHW", "OIHW", "NCHW"),
            preferred_element_type=jnp.float32)
        y = y + b.reshape(1, -1, 1, 1)
        if silu:
            if silu_bf16:
                y16 = y.astype(jnp.bfloat16)
                y = (y16 * jax.nn.sigmoid(y16)).astype(jnp.float32)
            else:
                y = y * jax.nn.sigmoid(y)
        return y.astype(out_dtype)

    w, b = params["conv_in"];  x = conv(gt, w, b, 1, True, jnp.bfloat16)
    w, b = params["down"];     x = conv(x, w, b, 2, True, jnp.bfloat16)
    w, b = params["conv_out"]; pred = conv(x, w, b, 1, False, jnp.float32)

    Z = posterior_params.shape[1] // 2
    m1, lv1 = posterior_params[:, :Z], jnp.clip(posterior_params[:, Z:], -30.0, 20.0)
    m2, lv2 = pred[:, :Z], jnp.clip(pred[:, Z:], -30.0, 20.0)
    kl = 0.5 * jnp.sum((m1 - m2) ** 2 * jnp.exp(-lv2) + jnp.exp(lv1 - lv2) - 1.0 - lv1 + lv2)
    return loss_weight * kl / posterior_params.shape[0]


if __name__ == "__main__":
    key = jax.random.PRNGKey(0)
    kp, kg, kq = jax.random.split(key, 3)

    B, C_IN, H, W = 2, 3, 16, 16
    Z = 4
    HL, WL = H // 2, W // 2                                    # latent spatial after stride-2

    enc_params = init_encoder_params(kp, c_in=C_IN, hidden=32, z_channels=Z)
    gt = jax.random.normal(kg, (B, C_IN, H, W), jnp.float32)                  # NCHW like PyTorch
    posterior_params = 0.5 * jax.random.normal(kq, (B, 2 * Z, HL, WL), jnp.float32)

    loss_fn = jax.jit(functools.partial(encoder_loss_kl, loss_weight=1.0))
    loss = jax.block_until_ready(loss_fn(posterior_params, gt, enc_params))
    assert loss.shape == () and bool(jnp.isfinite(loss))

    ref = jax.block_until_ready(_reference_loss(posterior_params, gt, enc_params, 1.0))
    assert jnp.allclose(loss, ref, rtol=2e-2, atol=1e-3), (float(loss), float(ref))

    print("KERNEL_OK")
</pallas_src>

<mosaic_0001>
module attributes {stable_mosaic.version = 11 : i64} {
  func.func @_conv3x3_act_kernel(%arg0: i32, %arg1: memref<1x1x16x422xbf16, #tpu.memory_space<vmem>>, %arg2: memref<32x144xbf16, #tpu.memory_space<vmem>>, %arg3: memref<32x1xf32, #tpu.memory_space<vmem>>, %arg4: memref<1x32x384xbf16, #tpu.memory_space<vmem>>, %arg5: memref<144x384xbf16, #tpu.memory_space<vmem>>) attributes {dimension_semantics = [#tpu.dimension_semantics<parallel>], iteration_bounds = array<i64: 2>, scalar_prefetch = 0 : i64, scratch_operands = 1 : i64, tpu.core_type = #tpu.core_type<tc>, window_params = [{transform_indices = @transform_0, window_bounds = array<i64: 1, 1, 16, 422>}, {pipeline_mode = #tpu.pipeline_mode<synchronous>, transform_indices = @transform_1, window_bounds = array<i64: 32, 144>}, {pipeline_mode = #tpu.pipeline_mode<synchronous>, transform_indices = @transform_2, window_bounds = array<i64: 32, 1>}, {transform_indices = @transform_3, window_bounds = array<i64: 1, 32, 384>}]} {
    %c0 = arith.constant 0 : index
    %c0_0 = arith.constant 0 : index
    %c0_1 = arith.constant 0 : index
    %c0_2 = arith.constant 0 : index
    %0 = vector.load %arg1[%c0, %c0_0, %c0_1, %c0_2] : memref<1x1x16x422xbf16, #tpu.memory_space<vmem>>, vector<1x1x16x384xbf16>
    %1 = vector.shape_cast %0 : vector<1x1x16x384xbf16> to vector<16x384xbf16>
    %c0_3 = arith.constant 0 : index
    %c0_4 = arith.constant 0 : index
    %2 = vector.load %arg5[%c0_3, %c0_4] : memref<144x384xbf16, #tpu.memory_space<vmem>>, vector<16x384xbf16>
    tpu.vector_store %arg5[%c0_3, %c0_4], %1 {strides = array<i32>} : memref<144x384xbf16, #tpu.memory_space<vmem>>, vector<16x384xbf16>,
    %c0_5 = arith.constant 0 : index
    %c0_6 = arith.constant 0 : index
    %c0_7 = arith.constant 0 : index
    %c1 = arith.constant 1 : index
    %3 = vector.load %arg1[%c0_5, %c0_6, %c0_7, %c1] : memref<1x1x16x422xbf16, #tpu.memory_space<vmem>>, vector<1x1x16x384xbf16>
    %4 = vector.shape_cast %3 : vector<1x1x16x384xbf16> to vector<16x384xbf16>
    %c16 = arith.constant 16 : index
    %c0_8 = arith.constant 0 : index
    %5 = vector.load %arg5[%c16, %c0_8] : memref<144x384xbf16, #tpu.memory_space<vmem>>, vector<16x384xbf16>
    tpu.vector_store %arg5[%c16, %c0_8], %4 {strides = array<i32>} : memref<144x384xbf16, #tpu.memory_space<vmem>>, vector<16x384xbf16>,
    %c0_9 = arith.constant 0 : index
    %c0_10 = arith.constant 0 : index
    %c0_11 = arith.constant 0 : index
    %c2 = arith.constant 2 : index
    %6 = vector.load %arg1[%c0_9, %c0_10, %c0_11, %c2] : memref<1x1x16x422xbf16, #tpu.memory_space<vmem>>, vector<1x1x16x384xbf16>
    %7 = vector.shape_cast %6 : vector<1x1x16x384xbf16> to vector<16x384xbf16>
    %c32 = arith.constant 32 : index
    %c0_12 = arith.constant 0 : index
    %8 = vector.load %arg5[%c32, %c0_12] : memref<144x384xbf16, #tpu.memory_space<vmem>>, vector<16x384xbf16>
    tpu.vector_store %arg5[%c32, %c0_12], %7 {strides = array<i32>} : memref<144x384xbf16, #tpu.memory_space<vmem>>, vector<16x384xbf16>,
    %c0_13 = arith.constant 0 : index
    %c0_14 = arith.constant 0 : index
    %c0_15 = arith.constant 0 : index
    %c18 = arith.constant 18 : index
    %9 = vector.load %arg1[%c0_13, %c0_14, %c0_15, %c18] : memref<1x1x16x422xbf16, #tpu.memory_space<vmem>>, vector<1x1x16x384xbf16>
    %10 = vector.shape_cast %9 : vector<1x1x16x384xbf16> to vector<16x384xbf16>
    %c48 = arith.constant 48 : index
    %c0_16 = arith.constant 0 : index
    %11 = vector.load %arg5[%c48, %c0_16] : memref<144x384xbf16, #tpu.memory_space<vmem>>, vector<16x384xbf16>
    tpu.vector_store %arg5[%c48, %c0_16], %10 {strides = array<i32>} : memref<144x384xbf16, #tpu.memory_space<vmem>>, vector<16x384xbf16>,
    %c0_17 = arith.constant 0 : index
    %c0_18 = arith.constant 0 : index
    %c0_19 = arith.constant 0 : index
    %c19 = arith.constant 19 : index
    %12 = vector.load %arg1[%c0_17, %c0_18, %c0_19, %c19] : memref<1x1x16x422xbf16, #tpu.memory_space<vmem>>, vector<1x1x16x384xbf16>
    %13 = vector.shape_cast %12 : vector<1x1x16x384xbf16> to vector<16x384xbf16>
    %c64 = arith.constant 64 : index
    %c0_20 = arith.constant 0 : index
    %14 = vector.load %arg5[%c64, %c0_20] : memref<144x384xbf16, #tpu.memory_space<vmem>>, vector<16x384xbf16>
    tpu.vector_store %arg5[%c64, %c0_20], %13 {strides = array<i32>} : memref<144x384xbf16, #tpu.memory_space<vmem>>, vector<16x384xbf16>,
    %c0_21 = arith.constant 0 : index
    %c0_22 = arith.constant 0 : index
    %c0_23 = arith.constant 0 : index
    %c20 = arith.constant 20 : index
    %15 = vector.load %arg1[%c0_21, %c0_22, %c0_23, %c20] : memref<1x1x16x422xbf16, #tpu.memory_space<vmem>>, vector<1x1x16x384xbf16>
    %16 = vector.shape_cast %15 : vector<1x1x16x384xbf16> to vector<16x384xbf16>
    %c80 = arith.constant 80 : index
    %c0_24 = arith.constant 0 : index
    %17 = vector.load %arg5[%c80, %c0_24] : memref<144x384xbf16, #tpu.memory_space<vmem>>, vector<16x384xbf16>
    tpu.vector_store %arg5[%c80, %c0_24], %16 {strides = array<i32>} : memref<144x384xbf16, #tpu.memory_space<vmem>>, vector<16x384xbf16>,
    %c0_25 = arith.constant 0 : index
    %c0_26 = arith.constant 0 : index
    %c0_27 = arith.constant 0 : index
    %c36 = arith.constant 36 : index
    %18 = vector.load %arg1[%c0_25, %c0_26, %c0_27, %c36] : memref<1x1x16x422xbf16, #tpu.memory_space<vmem>>, vector<1x1x16x384xbf16>
    %19 = vector.shape_cast %18 : vector<1x1x16x384xbf16> to vector<16x384xbf16>
    %c96 = arith.constant 96 : index
    %c0_28 = arith.constant 0 : index
    %20 = vector.load %arg5[%c96, %c0_28] : memref<144x384xbf16, #tpu.memory_space<vmem>>, vector<16x384xbf16>
    tpu.vector_store %arg5[%c96, %c0_28], %19 {strides = array<i32>} : memref<144x384xbf16, #tpu.memory_space<vmem>>, vector<16x384xbf16>,
    %c0_29 = arith.constant 0 : index
    %c0_30 = arith.constant 0 : index
    %c0_31 = arith.constant 0 : index
    %c37 = arith.constant 37 : index
    %21 = vector.load %arg1[%c0_29, %c0_30, %c0_31, %c37] : memref<1x1x16x422xbf16, #tpu.memory_space<vmem>>, vector<1x1x16x384xbf16>
    %22 = vector.shape_cast %21 : vector<1x1x16x384xbf16> to vector<16x384xbf16>
    %c112 = arith.constant 112 : index
    %c0_32 = arith.constant 0 : index
    %23 = vector.load %arg5[%c112, %c0_32] : memref<144x384xbf16, #tpu.memory_space<vmem>>, vector<16x384xbf16>
    tpu.vector_store %arg5[%c112, %c0_32], %22 {strides = array<i32>} : memref<144x384xbf16, #tpu.memory_space<vmem>>, vector<16x384xbf16>,
    %c0_33 = arith.constant 0 : index
    %c0_34 = arith.constant 0 : index
    %c0_35 = arith.constant 0 : index
    %c38 = arith.constant 38 : index
    %24 = vector.load %arg1[%c0_33, %c0_34, %c0_35, %c38] : memref<1x1x16x422xbf16, #tpu.memory_space<vmem>>, vector<1x1x16x384xbf16>
    %25 = vector.shape_cast %24 : vector<1x1x16x384xbf16> to vector<16x384xbf16>
    %c128 = arith.constant 128 : index
    %c0_36 = arith.constant 0 : index
    %26 = vector.load %arg5[%c128, %c0_36] : memref<144x384xbf16, #tpu.memory_space<vmem>>, vector<16x384xbf16>
    tpu.vector_store %arg5[%c128, %c0_36], %25 {strides = array<i32>} : memref<144x384xbf16, #tpu.memory_space<vmem>>, vector<16x384xbf16>,
    %c0_37 = arith.constant 0 : index
    %c0_38 = arith.constant 0 : index
    %27 = vector.load %arg2[%c0_37, %c0_38] : memref<32x144xbf16, #tpu.memory_space<vmem>>, vector<32x144xbf16>
    %c0_39 = arith.constant 0 : index
    %c0_40 = arith.constant 0 : index
    %28 = vector.load %arg5[%c0_39, %c0_40] : memref<144x384xbf16, #tpu.memory_space<vmem>>, vector<144x384xbf16>
    %cst = arith.constant dense<0.000000e+00> : vector<32x384xf32>
    %29 = tpu.matmul %27, %28, %cst {dimension_numbers = #tpu.dot_dimension_numbers<[1], [0], [0], [1], [0, 0, 1, 1], [], []>} : vector<32x144xbf16>, vector<144x384xbf16>, vector<32x384xf32> -> vector<32x384xf32>
    %c0_41 = arith.constant 0 : index
    %c0_42 = arith.constant 0 : index
    %30 = vector.load %arg3[%c0_41, %c0_42] : memref<32x1xf32, #tpu.memory_space<vmem>>, vector<32x1xf32>
    %31 = vector.broadcast %30 : vector<32x1xf32> to vector<32x384xf32>
    %32 = arith.addf %29, %31 : vector<32x384xf32>
    %33 = arith.negf %32 : vector<32x384xf32>
    %34 = math.exp %33 : vector<32x384xf32>
    %cst_43 = arith.constant 1.000000e+00 : f32
    %35 = vector.broadcast %cst_43 : f32 to vector<32x384xf32>
    %36 = arith.addf %35, %34 : vector<32x384xf32>
    %37 = arith.divf %35, %36 : vector<32x384xf32>
    %38 = arith.mulf %32, %37 : vector<32x384xf32>
    %39 = arith.truncf %38 : vector<32x384xf32> to vector<32x384xbf16>
    %c0_44 = arith.constant 0 : index
    %c0_45 = arith.constant 0 : index
    %c0_46 = arith.constant 0 : index
    %40 = vector.load %arg4[%c0_44, %c0_45, %c0_46] : memref<1x32x384xbf16, #tpu.memory_space<vmem>>, vector<1x32x384xbf16>
    %41 = vector.shape_cast %40 : vector<1x32x384xbf16> to vector<32x384xbf16>
    %42 = vector.shape_cast %39 : vector<32x384xbf16> to vector<1x32x384xbf16>
    tpu.vector_store %arg4[%c0_44, %c0_45, %c0_46], %42 {strides = array<i32>} : memref<1x32x384xbf16, #tpu.memory_space<vmem>>, vector<1x32x384xbf16>,
    return
  }
  func.func @transform_0(%arg0: i32) -> (i32, i32, i32, i32) {
    %c0_i32 = arith.constant 0 : i32
    %c0_i32_0 = arith.constant 0 : i32
    %c0_i32_1 = arith.constant 0 : i32
    %c0_i32_2 = arith.constant 0 : i32
    return %arg0, %c0_i32, %c0_i32_0, %c0_i32_1 : i32, i32, i32, i32
  }
  func.func @transform_1(%arg0: i32) -> (i32, i32) {
    %c0_i32 = arith.constant 0 : i32
    %c0_i32_0 = arith.constant 0 : i32
    %c0_i32_1 = arith.constant 0 : i32
    return %c0_i32, %c0_i32_0 : i32, i32
  }
  func.func @transform_2(%arg0: i32) -> (i32, i32) {
    %c0_i32 = arith.constant 0 : i32
    %c0_i32_0 = arith.constant 0 : i32
    %c0_i32_1 = arith.constant 0 : i32
    return %c0_i32, %c0_i32_0 : i32, i32
  }
  func.func @transform_3(%arg0: i32) -> (i32, i32, i32) {
    %c0_i32 = arith.constant 0 : i32
    %c0_i32_0 = arith.constant 0 : i32
    %c0_i32_1 = arith.constant 0 : i32
    return %arg0, %c0_i32, %c0_i32_0 : i32, i32, i32
  }
}

module attributes {stable_mosaic.version = 11 : i64} {
  func.func @_conv3x3_act_kernel(%arg0: i32, %arg1: memref<1x4x32x138xbf16, #tpu.memory_space<vmem>>, %arg2: memref<32x288xbf16, #tpu.memory_space<vmem>>, %arg3: memref<32x1xf32, #tpu.memory_space<vmem>>, %arg4: memref<1x32x128xbf16, #tpu.memory_space<vmem>>, %arg5: memref<288x128xbf16, #tpu.memory_space<vmem>>) attributes {dimension_semantics = [#tpu.dimension_semantics<parallel>], iteration_bounds = array<i64: 2>, scalar_prefetch = 0 : i64, scratch_operands = 1 : i64, tpu.core_type = #tpu.core_type<tc>, window_params = [{transform_indices = @transform_0, window_bounds = array<i64: 1, 4, 32, 138>}, {pipeline_mode = #tpu.pipeline_mode<synchronous>, transform_indices = @transform_1, window_bounds = array<i64: 32, 288>}, {pipeline_mode = #tpu.pipeline_mode<synchronous>, transform_indices = @transform_2, window_bounds = array<i64: 32, 1>}, {transform_indices = @transform_3, window_bounds = array<i64: 1, 32, 128>}]} {
    %c0 = arith.constant 0 : index
    %c0_0 = arith.constant 0 : index
    %c0_1 = arith.constant 0 : index
    %c0_2 = arith.constant 0 : index
    %0 = vector.load %arg1[%c0, %c0_0, %c0_1, %c0_2] : memref<1x4x32x138xbf16, #tpu.memory_space<vmem>>, vector<1x1x32x128xbf16>
    %1 = vector.shape_cast %0 : vector<1x1x32x128xbf16> to vector<32x128xbf16>
    %c0_3 = arith.constant 0 : index
    %c0_4 = arith.constant 0 : index
    %2 = vector.load %arg5[%c0_3, %c0_4] : memref<288x128xbf16, #tpu.memory_space<vmem>>, vector<32x128xbf16>
    tpu.vector_store %arg5[%c0_3, %c0_4], %1 {strides = array<i32>} : memref<288x128xbf16, #tpu.memory_space<vmem>>, vector<32x128xbf16>,
    %c0_5 = arith.constant 0 : index
    %c1 = arith.constant 1 : index
    %c0_6 = arith.constant 0 : index
    %c0_7 = arith.constant 0 : index
    %3 = vector.load %arg1[%c0_5, %c1, %c0_6, %c0_7] : memref<1x4x32x138xbf16, #tpu.memory_space<vmem>>, vector<1x1x32x128xbf16>
    %4 = vector.shape_cast %3 : vector<1x1x32x128xbf16> to vector<32x128xbf16>
    %c32 = arith.constant 32 : index
    %c0_8 = arith.constant 0 : index
    %5 = vector.load %arg5[%c32, %c0_8] : memref<288x128xbf16, #tpu.memory_space<vmem>>, vector<32x128xbf16>
    tpu.vector_store %arg5[%c32, %c0_8], %4 {strides = array<i32>} : memref<288x128xbf16, #tpu.memory_space<vmem>>, vector<32x128xbf16>,
    %c0_9 = arith.constant 0 : index
    %c0_10 = arith.constant 0 : index
    %c0_11 = arith.constant 0 : index
    %c1_12 = arith.constant 1 : index
    %6 = vector.load %arg1[%c0_9, %c0_10, %c0_11, %c1_12] : memref<1x4x32x138xbf16, #tpu.memory_space<vmem>>, vector<1x1x32x128xbf16>
    %7 = vector.shape_cast %6 : vector<1x1x32x128xbf16> to vector<32x128xbf16>
    %c64 = arith.constant 64 : index
    %c0_13 = arith.constant 0 : index
    %8 = vector.load %arg5[%c64, %c0_13] : memref<288x128xbf16, #tpu.memory_space<vmem>>, vector<32x128xbf16>
    tpu.vector_store %arg5[%c64, %c0_13], %7 {strides = array<i32>} : memref<288x128xbf16, #tpu.memory_space<vmem>>, vector<32x128xbf16>,
    %c0_14 = arith.constant 0 : index
    %c2 = arith.constant 2 : index
    %c0_15 = arith.constant 0 : index
    %c0_16 = arith.constant 0 : index
    %9 = vector.load %arg1[%c0_14, %c2, %c0_15, %c0_16] : memref<1x4x32x138xbf16, #tpu.memory_space<vmem>>, vector<1x1x32x128xbf16>
    %10 = vector.shape_cast %9 : vector<1x1x32x128xbf16> to vector<32x128xbf16>
    %c96 = arith.constant 96 : index
    %c0_17 = arith.constant 0 : index
    %11 = vector.load %arg5[%c96, %c0_17] : memref<288x128xbf16, #tpu.memory_space<vmem>>, vector<32x128xbf16>
    tpu.vector_store %arg5[%c96, %c0_17], %10 {strides = array<i32>} : memref<288x128xbf16, #tpu.memory_space<vmem>>, vector<32x128xbf16>,
    %c0_18 = arith.constant 0 : index
    %c3 = arith.constant 3 : index
    %c0_19 = arith.constant 0 : index
    %c0_20 = arith.constant 0 : index
    %12 = vector.load %arg1[%c0_18, %c3, %c0_19, %c0_20] : memref<1x4x32x138xbf16, #tpu.memory_space<vmem>>, vector<1x1x32x128xbf16>
    %13 = vector.shape_cast %12 : vector<1x1x32x128xbf16> to vector<32x128xbf16>
    %c128 = arith.constant 128 : index
    %c0_21 = arith.constant 0 : index
    %14 = vector.load %arg5[%c128, %c0_21] : memref<288x128xbf16, #tpu.memory_space<vmem>>, vector<32x128xbf16>
    tpu.vector_store %arg5[%c128, %c0_21], %13 {strides = array<i32>} : memref<288x128xbf16, #tpu.memory_space<vmem>>, vector<32x128xbf16>,
    %c0_22 = arith.constant 0 : index
    %c2_23 = arith.constant 2 : index
    %c0_24 = arith.constant 0 : index
    %c1_25 = arith.constant 1 : index
    %15 = vector.load %arg1[%c0_22, %c2_23, %c0_24, %c1_25] : memref<1x4x32x138xbf16, #tpu.memory_space<vmem>>, vector<1x1x32x128xbf16>
    %16 = vector.shape_cast %15 : vector<1x1x32x128xbf16> to vector<32x128xbf16>
    %c160 = arith.constant 160 : index
    %c0_26 = arith.constant 0 : index
    %17 = vector.load %arg5[%c160, %c0_26] : memref<288x128xbf16, #tpu.memory_space<vmem>>, vector<32x128xbf16>
    tpu.vector_store %arg5[%c160, %c0_26], %16 {strides = array<i32>} : memref<288x128xbf16, #tpu.memory_space<vmem>>, vector<32x128xbf16>,
    %c0_27 = arith.constant 0 : index
    %c0_28 = arith.constant 0 : index
    %c0_29 = arith.constant 0 : index
    %c9 = arith.constant 9 : index
    %18 = vector.load %arg1[%c0_27, %c0_28, %c0_29, %c9] : memref<1x4x32x138xbf16, #tpu.memory_space<vmem>>, vector<1x1x32x128xbf16>
    %19 = vector.shape_cast %18 : vector<1x1x32x128xbf16> to vector<32x128xbf16>
    %c192 = arith.constant 192 : index
    %c0_30 = arith.constant 0 : index
    %20 = vector.load %arg5[%c192, %c0_30] : memref<288x128xbf16, #tpu.memory_space<vmem>>, vector<32x128xbf16>
    tpu.vector_store %arg5[%c192, %c0_30], %19 {strides = array<i32>} : memref<288x128xbf16, #tpu.memory_space<vmem>>, vector<32x128xbf16>,
    %c0_31 = arith.constant 0 : index
    %c1_32 = arith.constant 1 : index
    %c0_33 = arith.constant 0 : index
    %c9_34 = arith.constant 9 : index
    %21 = vector.load %arg1[%c0_31, %c1_32, %c0_33, %c9_34] : memref<1x4x32x138xbf16, #tpu.memory_space<vmem>>, vector<1x1x32x128xbf16>
    %22 = vector.shape_cast %21 : vector<1x1x32x128xbf16> to vector<32x128xbf16>
    %c224 = arith.constant 224 : index
    %c0_35 = arith.constant 0 : index
    %23 = vector.load %arg5[%c224, %c0_35] : memref<288x128xbf16, #tpu.memory_space<vmem>>, vector<32x128xbf16>
    tpu.vector_store %arg5[%c224, %c0_35], %22 {strides = array<i32>} : memref<288x128xbf16, #tpu.memory_space<vmem>>, vector<32x128xbf16>,
    %c0_36 = arith.constant 0 : index
    %c0_37 = arith.constant 0 : index
    %c0_38 = arith.constant 0 : index
    %c10 = arith.constant 10 : index
    %24 = vector.load %arg1[%c0_36, %c0_37, %c0_38, %c10] : memref<1x4x32x138xbf16, #tpu.memory_space<vmem>>, vector<1x1x32x128xbf16>
    %25 = vector.shape_cast %24 : vector<1x1x32x128xbf16> to vector<32x128xbf16>
    %c256 = arith.constant 256 : index
    %c0_39 = arith.constant 0 : index
    %26 = vector.load %arg5[%c256, %c0_39] : memref<288x128xbf16, #tpu.memory_space<vmem>>, vector<32x128xbf16>
    tpu.vector_store %arg5[%c256, %c0_39], %25 {strides = array<i32>} : memref<288x128xbf16, #tpu.memory_space<vmem>>, vector<32x128xbf16>,
    %c0_40 = arith.constant 0 : index
    %c0_41 = arith.constant 0 : index
    %27 = vector.load %arg2[%c0_40, %c0_41] : memref<32x288xbf16, #tpu.memory_space<vmem>>, vector<32x288xbf16>
    %c0_42 = arith.constant 0 : index
    %c0_43 = arith.constant 0 : index
    %28 = vector.load %arg5[%c0_42, %c0_43] : memref<288x128xbf16, #tpu.memory_space<vmem>>, vector<288x128xbf16>
    %cst = arith.constant dense<0.000000e+00> : vector<32x128xf32>
    %29 = tpu.matmul %27, %28, %cst {dimension_numbers = #tpu.dot_dimension_numbers<[1], [0], [0], [1], [0, 0, 1, 1], [], []>} : vector<32x288xbf16>, vector<288x128xbf16>, vector<32x128xf32> -> vector<32x128xf32>
    %c0_44 = arith.constant 0 : index
    %c0_45 = arith.constant 0 : index
    %30 = vector.load %arg3[%c0_44, %c0_45] : memref<32x1xf32, #tpu.memory_space<vmem>>, vector<32x1xf32>
    %31 = vector.broadcast %30 : vector<32x1xf32> to vector<32x128xf32>
    %32 = arith.addf %29, %31 : vector<32x128xf32>
    %33 = arith.negf %32 : vector<32x128xf32>
    %34 = math.exp %33 : vector<32x128xf32>
    %cst_46 = arith.constant 1.000000e+00 : f32
    %35 = vector.broadcast %cst_46 : f32 to vector<32x128xf32>
    %36 = arith.addf %35, %34 : vector<32x128xf32>
    %37 = arith.divf %35, %36 : vector<32x128xf32>
    %38 = arith.mulf %32, %37 : vector<32x128xf32>
    %39 = arith.truncf %38 : vector<32x128xf32> to vector<32x128xbf16>
    %c0_47 = arith.constant 0 : index
    %c0_48 = arith.constant 0 : index
    %c0_49 = arith.constant 0 : index
    %40 = vector.load %arg4[%c0_47, %c0_48, %c0_49] : memref<1x32x128xbf16, #tpu.memory_space<vmem>>, vector<1x32x128xbf16>
    %41 = vector.shape_cast %40 : vector<1x32x128xbf16> to vector<32x128xbf16>
    %42 = vector.shape_cast %39 : vector<32x128xbf16> to vector<1x32x128xbf16>
    tpu.vector_store %arg4[%c0_47, %c0_48, %c0_49], %42 {strides = array<i32>} : memref<1x32x128xbf16, #tpu.memory_space<vmem>>, vector<1x32x128xbf16>,
    return
  }
  func.func @transform_0(%arg0: i32) -> (i32, i32, i32, i32) {
    %c0_i32 = arith.constant 0 : i32
    %c0_i32_0 = arith.constant 0 : i32
    %c0_i32_1 = arith.constant 0 : i32
    %c0_i32_2 = arith.constant 0 : i32
    return %arg0, %c0_i32, %c0_i32_0, %c0_i32_1 : i32, i32, i32, i32
  }
  func.func @transform_1(%arg0: i32) -> (i32, i32) {
    %c0_i32 = arith.constant 0 : i32
    %c0_i32_0 = arith.constant 0 : i32
    %c0_i32_1 = arith.constant 0 : i32
    return %c0_i32, %c0_i32_0 : i32, i32
  }
  func.func @transform_2(%arg0: i32) -> (i32, i32) {
    %c0_i32 = arith.constant 0 : i32
    %c0_i32_0 = arith.constant 0 : i32
    %c0_i32_1 = arith.constant 0 : i32
    return %c0_i32, %c0_i32_0 : i32, i32
  }
  func.func @transform_3(%arg0: i32) -> (i32, i32, i32) {
    %c0_i32 = arith.constant 0 : i32
    %c0_i32_0 = arith.constant 0 : i32
    %c0_i32_1 = arith.constant 0 : i32
    return %arg0, %c0_i32, %c0_i32_0 : i32, i32, i32
  }
}

module attributes {stable_mosaic.version = 11 : i64} {
  func.func @_conv3x3_kl_kernel(%arg0: i32, %arg1: memref<1x1x32x150xbf16, #tpu.memory_space<vmem>>, %arg2: memref<8x288xbf16, #tpu.memory_space<vmem>>, %arg3: memref<8x1xf32, #tpu.memory_space<vmem>>, %arg4: memref<1x8x128xf32, #tpu.memory_space<vmem>>, %arg5: memref<1x1x1xf32, #tpu.memory_space<vmem>>, %arg6: memref<288x128xbf16, #tpu.memory_space<vmem>>) attributes {dimension_semantics = [#tpu.dimension_semantics<parallel>], iteration_bounds = array<i64: 2>, scalar_prefetch = 0 : i64, scratch_operands = 1 : i64, tpu.core_type = #tpu.core_type<tc>, window_params = [{transform_indices = @transform_0, window_bounds = array<i64: 1, 1, 32, 150>}, {pipeline_mode = #tpu.pipeline_mode<synchronous>, transform_indices = @transform_1, window_bounds = array<i64: 8, 288>}, {pipeline_mode = #tpu.pipeline_mode<synchronous>, transform_indices = @transform_2, window_bounds = array<i64: 8, 1>}, {transform_indices = @transform_3, window_bounds = array<i64: 1, 8, 128>}, {transform_indices = @transform_4, window_bounds = array<i64: 1, 1, 1>}]} {
    %c0 = arith.constant 0 : index
    %c0_0 = arith.constant 0 : index
    %c0_1 = arith.constant 0 : index
    %c0_2 = arith.constant 0 : index
    %0 = vector.load %arg1[%c0, %c0_0, %c0_1, %c0_2] : memref<1x1x32x150xbf16, #tpu.memory_space<vmem>>, vector<1x1x32x128xbf16>
    %1 = vector.shape_cast %0 : vector<1x1x32x128xbf16> to vector<32x128xbf16>
    %c0_3 = arith.constant 0 : index
    %c0_4 = arith.constant 0 : index
    %2 = vector.load %arg6[%c0_3, %c0_4] : memref<288x128xbf16, #tpu.memory_space<vmem>>, vector<32x128xbf16>
    tpu.vector_store %arg6[%c0_3, %c0_4], %1 {strides = array<i32>} : memref<288x128xbf16, #tpu.memory_space<vmem>>, vector<32x128xbf16>,
    %c0_5 = arith.constant 0 : index
    %c0_6 = arith.constant 0 : index
    %c0_7 = arith.constant 0 : index
    %c1 = arith.constant 1 : index
    %3 = vector.load %arg1[%c0_5, %c0_6, %c0_7, %c1] : memref<1x1x32x150xbf16, #tpu.memory_space<vmem>>, vector<1x1x32x128xbf16>
    %4 = vector.shape_cast %3 : vector<1x1x32x128xbf16> to vector<32x128xbf16>
    %c32 = arith.constant 32 : index
    %c0_8 = arith.constant 0 : index
    %5 = vector.load %arg6[%c32, %c0_8] : memref<288x128xbf16, #tpu.memory_space<vmem>>, vector<32x128xbf16>
    tpu.vector_store %arg6[%c32, %c0_8], %4 {strides = array<i32>} : memref<288x128xbf16, #tpu.memory_space<vmem>>, vector<32x128xbf16>,
    %c0_9 = arith.constant 0 : index
    %c0_10 = arith.constant 0 : index
    %c0_11 = arith.constant 0 : index
    %c2 = arith.constant 2 : index
    %6 = vector.load %arg1[%c0_9, %c0_10, %c0_11, %c2] : memref<1x1x32x150xbf16, #tpu.memory_space<vmem>>, vector<1x1x32x128xbf16>
    %7 = vector.shape_cast %6 : vector<1x1x32x128xbf16> to vector<32x128xbf16>
    %c64 = arith.constant 64 : index
    %c0_12 = arith.constant 0 : index
    %8 = vector.load %arg6[%c64, %c0_12] : memref<288x128xbf16, #tpu.memory_space<vmem>>, vector<32x128xbf16>
    tpu.vector_store %arg6[%c64, %c0_12], %7 {strides = array<i32>} : memref<288x128xbf16, #tpu.memory_space<vmem>>, vector<32x128xbf16>,
    %c0_13 = arith.constant 0 : index
    %c0_14 = arith.constant 0 : index
    %c0_15 = arith.constant 0 : index
    %c10 = arith.constant 10 : index
    %9 = vector.load %arg1[%c0_13, %c0_14, %c0_15, %c10] : memref<1x1x32x150xbf16, #tpu.memory_space<vmem>>, vector<1x1x32x128xbf16>
    %10 = vector.shape_cast %9 : vector<1x1x32x128xbf16> to vector<32x128xbf16>
    %c96 = arith.constant 96 : index
    %c0_16 = arith.constant 0 : index
    %11 = vector.load %arg6[%c96, %c0_16] : memref<288x128xbf16, #tpu.memory_space<vmem>>, vector<32x128xbf16>
    tpu.vector_store %arg6[%c96, %c0_16], %10 {strides = array<i32>} : memref<288x128xbf16, #tpu.memory_space<vmem>>, vector<32x128xbf16>,
    %c0_17 = arith.constant 0 : index
    %c0_18 = arith.constant 0 : index
    %c0_19 = arith.constant 0 : index
    %c11 = arith.constant 11 : index
    %12 = vector.load %arg1[%c0_17, %c0_18, %c0_19, %c11] : memref<1x1x32x150xbf16, #tpu.memory_space<vmem>>, vector<1x1x32x128xbf16>
    %13 = vector.shape_cast %12 : vector<1x1x32x128xbf16> to vector<32x128xbf16>
    %c128 = arith.constant 128 : index
    %c0_20 = arith.constant 0 : index
    %14 = vector.load %arg6[%c128, %c0_20] : memref<288x128xbf16, #tpu.memory_space<vmem>>, vector<32x128xbf16>
    tpu.vector_store %arg6[%c128, %c0_20], %13 {strides = array<i32>} : memref<288x128xbf16, #tpu.memory_space<vmem>>, vector<32x128xbf16>,
    %c0_21 = arith.constant 0 : index
    %c0_22 = arith.constant 0 : index
    %c0_23 = arith.constant 0 : index
    %c12 = arith.constant 12 : index
    %15 = vector.load %arg1[%c0_21, %c0_22, %c0_23, %c12] : memref<1x1x32x150xbf16, #tpu.memory_space<vmem>>, vector<1x1x32x128xbf16>
    %16 = vector.shape_cast %15 : vector<1x1x32x128xbf16> to vector<32x128xbf16>
    %c160 = arith.constant 160 : index
    %c0_24 = arith.constant 0 : index
    %17 = vector.load %arg6[%c160, %c0_24] : memref<288x128xbf16, #tpu.memory_space<vmem>>, vector<32x128xbf16>
    tpu.vector_store %arg6[%c160, %c0_24], %16 {strides = array<i32>} : memref<288x128xbf16, #tpu.memory_space<vmem>>, vector<32x128xbf16>,
    %c0_25 = arith.constant 0 : index
    %c0_26 = arith.constant 0 : index
    %c0_27 = arith.constant 0 : index
    %c20 = arith.constant 20 : index
    %18 = vector.load %arg1[%c0_25, %c0_26, %c0_27, %c20] : memref<1x1x32x150xbf16, #tpu.memory_space<vmem>>, vector<1x1x32x128xbf16>
    %19 = vector.shape_cast %18 : vector<1x1x32x128xbf16> to vector<32x128xbf16>
    %c192 = arith.constant 192 : index
    %c0_28 = arith.constant 0 : index
    %20 = vector.load %arg6[%c192, %c0_28] : memref<288x128xbf16, #tpu.memory_space<vmem>>, vector<32x128xbf16>
    tpu.vector_store %arg6[%c192, %c0_28], %19 {strides = array<i32>} : memref<288x128xbf16, #tpu.memory_space<vmem>>, vector<32x128xbf16>,
    %c0_29 = arith.constant 0 : index
    %c0_30 = arith.constant 0 : index
    %c0_31 = arith.constant 0 : index
    %c21 = arith.constant 21 : index
    %21 = vector.load %arg1[%c0_29, %c0_30, %c0_31, %c21] : memref<1x1x32x150xbf16, #tpu.memory_space<vmem>>, vector<1x1x32x128xbf16>
    %22 = vector.shape_cast %21 : vector<1x1x32x128xbf16> to vector<32x128xbf16>
    %c224 = arith.constant 224 : index
    %c0_32 = arith.constant 0 : index
    %23 = vector.load %arg6[%c224, %c0_32] : memref<288x128xbf16, #tpu.memory_space<vmem>>, vector<32x128xbf16>
    tpu.vector_store %arg6[%c224, %c0_32], %22 {strides = array<i32>} : memref<288x128xbf16, #tpu.memory_space<vmem>>, vector<32x128xbf16>,
    %c0_33 = arith.constant 0 : index
    %c0_34 = arith.constant 0 : index
    %c0_35 = arith.constant 0 : index
    %c22 = arith.constant 22 : index
    %24 = vector.load %arg1[%c0_33, %c0_34, %c0_35, %c22] : memref<1x1x32x150xbf16, #tpu.memory_space<vmem>>, vector<1x1x32x128xbf16>
    %25 = vector.shape_cast %24 : vector<1x1x32x128xbf16> to vector<32x128xbf16>
    %c256 = arith.constant 256 : index
    %c0_36 = arith.constant 0 : index
    %26 = vector.load %arg6[%c256, %c0_36] : memref<288x128xbf16, #tpu.memory_space<vmem>>, vector<32x128xbf16>
    tpu.vector_store %arg6[%c256, %c0_36], %25 {strides = array<i32>} : memref<288x128xbf16, #tpu.memory_space<vmem>>, vector<32x128xbf16>,
    %c0_37 = arith.constant 0 : index
    %c0_38 = arith.constant 0 : index
    %27 = vector.load %arg2[%c0_37, %c0_38] : memref<8x288xbf16, #tpu.memory_space<vmem>>, vector<8x288xbf16>
    %c0_39 = arith.constant 0 : index
    %c0_40 = arith.constant 0 : index
    %28 = vector.load %arg6[%c0_39, %c0_40] : memref<288x128xbf16, #tpu.memory_space<vmem>>, vector<288x128xbf16>
    %cst = arith.constant dense<0.000000e+00> : vector<8x128xf32>
    %29 = tpu.matmul %27, %28, %cst {dimension_numbers = #tpu.dot_dimension_numbers<[1], [0], [0], [1], [0, 0, 1, 1], [], []>} : vector<8x288xbf16>, vector<288x128xbf16>, vector<8x128xf32> -> vector<8x128xf32>
    %c0_41 = arith.constant 0 : index
    %c0_42 = arith.constant 0 : index
    %30 = vector.load %arg3[%c0_41, %c0_42] : memref<8x1xf32, #tpu.memory_space<vmem>>, vector<8x1xf32>
    %31 = vector.broadcast %30 : vector<8x1xf32> to vector<8x128xf32>
    %32 = arith.addf %29, %31 : vector<8x128xf32>
    %33 = vector.extract_strided_slice %32 {offsets = [0, 0], sizes = [4, 128], strides = [1, 1]} : vector<8x128xf32> to vector<4x128xf32>
    %34 = vector.extract_strided_slice %32 {offsets = [4, 0], sizes = [4, 128], strides = [1, 1]} : vector<8x128xf32> to vector<4x128xf32>
    %cst_43 = arith.constant -3.000000e+01 : f32
    %cst_44 = arith.constant 2.000000e+01 : f32
    %35 = vector.broadcast %cst_43 : f32 to vector<4x128xf32>
    %36 = arith.maximumf %35, %34 : vector<4x128xf32>
    %37 = vector.broadcast %cst_44 : f32 to vector<4x128xf32>
    %38 = arith.minimumf %37, %36 : vector<4x128xf32>
    %c0_45 = arith.constant 0 : index
    %c0_46 = arith.constant 0 : index
    %c0_47 = arith.constant 0 : index
    %39 = vector.load %arg4[%c0_45, %c0_46, %c0_47] : memref<1x8x128xf32, #tpu.memory_space<vmem>>, vector<1x4x128xf32>
    %40 = vector.shape_cast %39 : vector<1x4x128xf32> to vector<4x128xf32>
    %c0_48 = arith.constant 0 : index
    %c4 = arith.constant 4 : index
    %c0_49 = arith.constant 0 : index
    %41 = vector.load %arg4[%c0_48, %c4, %c0_49] : memref<1x8x128xf32, #tpu.memory_space<vmem>>, vector<1x4x128xf32>
    %42 = vector.shape_cast %41 : vector<1x4x128xf32> to vector<4x128xf32>
    %cst_50 = arith.constant -3.000000e+01 : f32
    %cst_51 = arith.constant 2.000000e+01 : f32
    %43 = vector.broadcast %cst_50 : f32 to vector<4x128xf32>
    %44 = arith.maximumf %43, %42 : vector<4x128xf32>
    %45 = vector.broadcast %cst_51 : f32 to vector<4x128xf32>
    %46 = arith.minimumf %45, %44 : vector<4x128xf32>
    %47 = arith.subf %40, %33 : vector<4x128xf32>
    %48 = arith.mulf %47, %47 : vector<4x128xf32>
    %cst_52 = arith.constant 0.000000e+00 : f32
    %49 = vector.broadcast %cst_52 : f32 to vector<4x128xf32>
    %50 = arith.subf %49, %38 : vector<4x128xf32>
    %51 = math.exp %50 : vector<4x128xf32>
    %52 = arith.mulf %48, %51 : vector<4x128xf32>
    %53 = arith.subf %46, %38 : vector<4x128xf32>
    %54 = math.exp %53 : vector<4x128xf32>
    %55 = arith.addf %52, %54 : vector<4x128xf32>
    %cst_53 = arith.constant 1.000000e+00 : f32
    %56 = vector.broadcast %cst_53 : f32 to vector<4x128xf32>
    %57 = arith.subf %55, %56 : vector<4x128xf32>
    %58 = arith.subf %57, %46 : vector<4x128xf32>
    %59 = arith.addf %58, %38 : vector<4x128xf32>
    %60 = tpu.iota {dimensions = array<i32: 1>} : vector<4x128xi32>
    %c80_i32 = arith.constant 80 : i32
    %61 = vector.broadcast %c80_i32 : i32 to vector<4x128xi32>
    %62 = arith.cmpi slt, %60, %61 : vector<4x128xi32>
    %c10_i32 = arith.constant 10 : i32
    %c0_i32 = arith.constant 0 : i32
    %63 = arith.cmpi eq, %c10_i32, %c0_i32 : i32
    %c1_i32 = arith.constant 1 : i32
    %64 = arith.select %63, %c1_i32, %c10_i32 : i32
    %65 = vector.broadcast %64 : i32 to vector<4x128xi32>
    %66 = arith.remsi %60, %65 : vector<4x128xi32>
    %c0_i32_54 = arith.constant 0 : i32
    %67 = vector.broadcast %c0_i32_54 : i32 to vector<4x128xi32>
    %68 = arith.cmpi ne, %66, %67 : vector<4x128xi32>
    %c0_i32_55 = arith.constant 0 : i32
    %69 = vector.broadcast %c0_i32_55 : i32 to vector<4x128xi32>
    %70 = arith.cmpi slt, %66, %69 : vector<4x128xi32>
    %c0_i32_56 = arith.constant 0 : i32
    %71 = arith.cmpi slt, %64, %c0_i32_56 : i32
    %72 = vector.broadcast %71 : i1 to vector<4x128xi1>
    %73 = vector.broadcast %72 : vector<4x128xi1> to vector<4x128xi1>
    %74 = arith.xori %70, %73 : vector<4x128xi1>
    %75 = arith.andi %74, %68 : vector<4x128xi1>
    %76 = vector.broadcast %64 : i32 to vector<4x128xi32>
    %77 = arith.addi %66, %76 : vector<4x128xi32>
    %78 = arith.select %75, %77, %66 : vector<4x128xi1>, vector<4x128xi32>
    %c8_i32 = arith.constant 8 : i32
    %79 = vector.broadcast %c8_i32 : i32 to vector<4x128xi32>
    %80 = arith.cmpi slt, %78, %79 : vector<4x128xi32>
    %81 = arith.andi %62, %80 : vector<4x128xi1>
    %cst_57 = arith.constant 0.000000e+00 : f32
    %82 = vector.broadcast %cst_57 : f32 to vector<4x128xf32>
    %83 = arith.select %81, %59, %82 : vector<4x128xi1>, vector<4x128xf32>
    %84 = vector.shape_cast %83 : vector<4x128xf32> to vector<1x4x128xf32>
    %cst_58 = arith.constant dense<0.000000e+00> : vector<1xf32>
    %85 = vector.multi_reduction <add>, %84, %cst_58 [1, 2] : vector<1x4x128xf32> to vector<1xf32>
    %86 = vector.shape_cast %85 : vector<1xf32> to vector<1x1x1xf32>
    %87 = vector.extract %86[0, 0, 0] : f32 from vector<1x1x1xf32>
    %88 = vector.broadcast %87 : f32 to vector<1x1xf32>
    %cst_59 = arith.constant 5.000000e-01 : f32
    %89 = vector.broadcast %cst_59 : f32 to vector<1x1xf32>
    %90 = arith.mulf %89, %88 : vector<1x1xf32>
    %c0_60 = arith.constant 0 : index
    %c0_61 = arith.constant 0 : index
    %c0_62 = arith.constant 0 : index
    %91 = vector.load %arg5[%c0_60, %c0_61, %c0_62] : memref<1x1x1xf32, #tpu.memory_space<vmem>>, vector<1x1x1xf32>
    %92 = vector.shape_cast %91 : vector<1x1x1xf32> to vector<1x1xf32>
    %93 = vector.shape_cast %90 : vector<1x1xf32> to vector<1x1x1xf32>
    tpu.vector_store %arg5[%c0_60, %c0_61, %c0_62], %93 {strides = array<i32>} : memref<1x1x1xf32, #tpu.memory_space<vmem>>, vector<1x1x1xf32>,
    return
  }
  func.func @transform_0(%arg0: i32) -> (i32, i32, i32, i32) {
    %c0_i32 = arith.constant 0 : i32
    %c0_i32_0 = arith.constant 0 : i32
    %c0_i32_1 = arith.constant 0 : i32
    %c0_i32_2 = arith.constant 0 : i32
    return %arg0, %c0_i32, %c0_i32_0, %c0_i32_1 : i32, i32, i32, i32
  }
  func.func @transform_1(%arg0: i32) -> (i32, i32) {
    %c0_i32 = arith.constant 0 : i32
    %c0_i32_0 = arith.constant 0 : i32
    %c0_i32_1 = arith.constant 0 : i32
    return %c0_i32, %c0_i32_0 : i32, i32
  }
  func.func @transform_2(%arg0: i32) -> (i32, i32) {
    %c0_i32 = arith.constant 0 : i32
    %c0_i32_0 = arith.constant 0 : i32
    %c0_i32_1 = arith.constant 0 : i32
    return %c0_i32, %c0_i32_0 : i32, i32
  }
  func.func @transform_3(%arg0: i32) -> (i32, i32, i32) {
    %c0_i32 = arith.constant 0 : i32
    %c0_i32_0 = arith.constant 0 : i32
    %c0_i32_1 = arith.constant 0 : i32
    return %arg0, %c0_i32, %c0_i32_0 : i32, i32, i32
  }
  func.func @transform_4(%arg0: i32) -> (i32, i32, i32) {
    %c0_i32 = arith.constant 0 : i32
    %c0_i32_0 = arith.constant 0 : i32
    %c0_i32_1 = arith.constant 0 : i32
    return %arg0, %c0_i32, %c0_i32_0 : i32, i32, i32
  }
}

</mosaic_0001>

<llo_original>
// kernel: encoder_loss_kl.3
$region0: #{encoder_loss_kl.3}
  #allocation0 [shape = 'u32[]', space=smem, size = 0x4, offset = 0x4, fixed_abs, tag = 'smem constant byte address 0x4 - core index']
  #allocation1 [shape = 'u32[144,128]{1,0:T(1,128)}', space=vmem, size = 0x12000, scoped, tag = 'internal scratch']
  #allocation2 [shape = 'bf16[144,384]{1,0:T(16,128)(2,1)}', space=vmem, size = 0x1b000, scoped, tag = 'scratch operand']
  %s0 = inlined_call_operand.vmem [shape: bf16[2,1,16,422], index: 0, kind: input, shape index: {}]
  %s1 = inlined_call_operand.vmem [shape: bf16[32,144], index: 1, kind: input, shape index: {}]
  %s2 = inlined_call_operand.vmem [shape: f32[32,1], index: 2, kind: input, shape index: {}]
  %s3 = inlined_call_operand.vmem [shape: bf16[2,32,384], index: 3, kind: output, shape index: {}]
  %s4 = sld [smem:[#allocation0]]
  $region45: #{encoder_loss_kl.3} parent=0
    _
  %s6 = ssub.s32 1, %s4
  %s7 = scalar_select 0, %s6, %s4
  loop: start=0, step=1, limit=4
  $region2: #{encoder_loss_kl.3} parent=0 // loop_pre_header
    _
  $region3: #{encoder_loss_kl.3} parent=0 // loop_header
    %s9 = sphi 0, %s13
    %p10 = scmp.ge.s32.totalorder %s9, 4
    %s19 = sphi 0, %s21
    %s22 = sphi 0, %s19
    %s23 = sphi 0, %s22
    %s39 = sphi 0, %s23
    %s43 = sphi 0, %s43
    %s45 = sphi 0, %s43
    %s46 = sphi 0, %s45
    %s60 = sphi 0, %s46
    %s64 = sphi 0, %s64
    %s66 = sphi 0, %s64
    %s67 = sphi 0, %s66
    %s81 = sphi 0, %s67
    %s87 = sphi 0, %s89
    %s90 = sphi 0, %s87
    %s91 = sphi 0, %s90
    %s107 = sphi 0, %s91
  $region4: #{encoder_loss_kl.3} parent=0 // loop_header_branch
    %12 = sbr.rel (%p10) target = $region8
  $region5: #{encoder_loss_kl.3} parent=0 // loop_body
    %s14 = ssub.s32 %s9, 1
    %s15 = ssub.s32 %s9, 2
    %s16 = sadd.s32 %s9, 1
    %s17 = ssub.s32 %s9, %s16
    %p18 = scmp.eq.s32.totalorder %s17, 0
    %s20 = sadd.s32 %s19, 1
    %s21 = scalar_select %p18, %s19, %s20
    %p24 = pneg %p18
    %p25 = scmp.eq.s32.totalorder %s9, 1
    %p26 = por %p24, %p25
    %p27 = scmp.ne.s32.totalorder %s19, %s22
    %p28 = scmp.eq.s32.totalorder %s9, 0
    %p29 = por %p27, %p28
    %p30 = scmp.ne.s32.totalorder %s19, %s22
    %p31 = scmp.eq.s32.totalorder %s14, 1
    %p32 = por %p30, %p31
    %p33 = scmp.ne.s32.totalorder %s22, %s23
    %p34 = scmp.eq.s32.totalorder %s14, 0
    %p35 = por %p33, %p34
    %p36 = scmp.ne.s32.totalorder %s22, %s23
    %p37 = scmp.eq.s32.totalorder %s15, 1
    %p38 = por %p36, %p37
    %p40 = scmp.ne.s32.totalorder %s23, %s39
    %p41 = scmp.eq.s32.totalorder %s15, 0
    %p42 = por %p40, %p41
    %s44 = sadd.s32 %s43, 1
    %p47 = scmp.eq.s32.totalorder %s9, 1
    %p48 = scmp.ne.s32.totalorder %s43, %s45
    %p49 = scmp.eq.s32.totalorder %s9, 0
    %p50 = por %p48, %p49
    %p51 = scmp.ne.s32.totalorder %s43, %s45
    %p52 = scmp.eq.s32.totalorder %s14, 1
    %p53 = por %p51, %p52
    %p54 = scmp.ne.s32.totalorder %s45, %s46
    %p55 = scmp.eq.s32.totalorder %s14, 0
    %p56 = por %p54, %p55
    %p57 = scmp.ne.s32.totalorder %s45, %s46
    %p58 = scmp.eq.s32.totalorder %s15, 1
    %p59 = por %p57, %p58
    %p61 = scmp.ne.s32.totalorder %s46, %s60
    %p62 = scmp.eq.s32.totalorder %s15, 0
    %p63 = por %p61, %p62
    %s65 = sadd.s32 %s64, 1
    %p68 = scmp.eq.s32.totalorder %s9, 1
    %p69 = scmp.ne.s32.totalorder %s64, %s66
    %p70 = scmp.eq.s32.totalorder %s9, 0
    %p71 = por %p69, %p70
    %p72 = scmp.ne.s32.totalorder %s64, %s66
    %p73 = scmp.eq.s32.totalorder %s14, 1
    %p74 = por %p72, %p73
    %p75 = scmp.ne.s32.totalorder %s66, %s67
    %p76 = scmp.eq.s32.totalorder %s14, 0
    %p77 = por %p75, %p76
    %p78 = scmp.ne.s32.totalorder %s66, %s67
    %p79 = scmp.eq.s32.totalorder %s15, 1
    %p80 = por %p78, %p79
    %p82 = scmp.ne.s32.totalorder %s67, %s81
    %p83 = scmp.eq.s32.totalorder %s15, 0
    %p84 = por %p82, %p83
    %s85 = ssub.s32 %s9, %s16
    %p86 = scmp.eq.s32.totalorder %s85, 0
    %s88 = sadd.s32 %s87, 1
    %s89 = scalar_select %p86, %s87, %s88
    %p92 = pneg %p86
    %p93 = scmp.eq.s32.totalorder %s9, 1
    %p94 = por %p92, %p93
    %p95 = scmp.ne.s32.totalorder %s87, %s90
    %p96 = scmp.eq.s32.totalorder %s9, 0
    %p97 = por %p95, %p96
    %p98 = scmp.ne.s32.totalorder %s87, %s90
    %p99 = scmp.eq.s32.totalorder %s14, 1
    %p100 = por %p98, %p99
    %p101 = scmp.ne.s32.totalorder %s90, %s91
    %p102 = scmp.eq.s32.totalorder %s14, 0
    %p103 = por %p101, %p102
    %p104 = scmp.ne.s32.totalorder %s90, %s91
    %p105 = scmp.eq.s32.totalorder %s15, 1
    %p106 = por %p104, %p105
    %p108 = scmp.ne.s32.totalorder %s91, %s107
    %p109 = scmp.eq.s32.totalorder %s15, 0
    %p110 = por %p108, %p109
    %p111 = scmp.le.s32.totalorder 1, %s9
    %p112 = scmp.lt.s32.totalorder %s9, 3
    %p113 = pnand %p111, %p112
    %p114 = pneg %p113
    // Predicated region
    $region9: #{encoder_loss_kl.3} parent=5 // pred_check
      _
    $region10: #{encoder_loss_kl.3} parent=5 // pred_check_branch
      %116 = sbr.rel (%p113) target = $region12
    $region11: #{encoder_loss_kl.3} parent=5 // pred_region
      %s117 = ssub.s32 %s9, 1
      // Predicated region
      $region13: #{encoder_loss_kl.3} parent=11 // pred_check
        %p118 = pneg %p56
      $region14: #{encoder_loss_kl.3} parent=11 // pred_check_branch
        %120 = sbr.rel (%p118) target = $region16
      $region15: #{encoder_loss_kl.3} parent=11 // pred_region
        _
      $region16: #{encoder_loss_kl.3} parent=11 // pred_fallthru
        _
      // Predicated region
      $region17: #{encoder_loss_kl.3} parent=11 // pred_check
        %p121 = pneg %p77
      $region18: #{encoder_loss_kl.3} parent=11 // pred_check_branch
        %123 = sbr.rel (%p121) target = $region20
      $region19: #{encoder_loss_kl.3} parent=11 // pred_region
        _
      $region20: #{encoder_loss_kl.3} parent=11 // pred_fallthru
        _
    $region12: #{encoder_loss_kl.3} parent=5 // pred_fallthru
      _
    %p124 = scmp.lt.s32.totalorder %s9, 2
    // Predicated region
    $region21: #{encoder_loss_kl.3} parent=5 // pred_check
      %p125 = pneg %p124
    $region22: #{encoder_loss_kl.3} parent=5 // pred_check_branch
      %127 = sbr.rel (%p125) target = $region24
    $region23: #{encoder_loss_kl.3} parent=5 // pred_region
      // Predicated region
      $region25: #{encoder_loss_kl.3} parent=23 // pred_check
        %p128 = pneg %p29
      $region26: #{encoder_loss_kl.3} parent=23 // pred_check_branch
        %130 = sbr.rel (%p128) target = $region28
      $region27: #{encoder_loss_kl.3} parent=23 // pred_region
        %p131 = scmp.lt.s32.totalorder %s9, 1
        %s132 = scalar_select %p131, %s9, 1
        %s133 = smul.addr %s132, 8
        %s134 = smul.addr %s133, 4
        %s135 = scalar_lea.vmem %s0, %s134
      $region28: #{encoder_loss_kl.3} parent=23 // pred_fallthru
        _
    $region24: #{encoder_loss_kl.3} parent=5 // pred_fallthru
      _
    %p136 = scmp.le.s32.totalorder 1, %s9
    %p137 = scmp.lt.s32.totalorder %s9, 3
    %p138 = pnand %p136, %p137
    %p139 = pneg %p138
    // Predicated region
    $region29: #{encoder_loss_kl.3} parent=5 // pred_check
      _
    $region30: #{encoder_loss_kl.3} parent=5 // pred_check_branch
      %141 = sbr.rel (%p138) target = $region32
    $region31: #{encoder_loss_kl.3} parent=5 // pred_region
      %s142 = ssub.s32 %s9, 1
      %p143 = scmp.lt.s32.totalorder %s14, 1
      %s144 = scalar_select %p143, %s14, 1
      %s145 = smul.addr %s144, 8
      %s146 = smul.addr %s145, 4
      %s147 = scalar_lea.vmem %s0, %s146
      %p148 = pneg %p35
      %p149 = pneg %p32
      %p150 = pneg %p56
      %p151 = pneg %p53
      %p152 = pneg %p77
      %p153 = pneg %p74
      %p154 = pneg %p103
      %p155 = pneg %p100
      %p156 = scmp.lt.s32.totalorder %s14, 1
      %s157 = scalar_select %p156, %s14, 1
      %s158 = smul.addr %s157, 12
      %s159 = smul.addr %s158, 4
      %s160 = scalar_lea.vmem %s3, %s159
      %p161 = scmp.lt.s32.totalorder %s14, 1
      %s162 = scalar_select %p161, %s14, 1
      %s163 = smul.addr %s162, 8
      %s164 = smul.addr %s163, 4
      %s165 = scalar_lea.vmem %s0, %s164
      %p166 = scmp.lt.s32.totalorder %s14, 1
      %s167 = scalar_select %p166, %s14, 1
      %s168 = smul.addr %s167, 12
      %s169 = smul.addr %s168, 4
      %s170 = scalar_lea.vmem %s3, %s169
      %v172 = vld [vmem:[%s165] sm:$0xff]
      %v173 = vld [vmem:[%s165 + $0x8] sm:$0xf]
      %v174 = vld [vmem:[%s165 + $0x10] sm:$0xff]
      %v175 = vld [vmem:[%s165 + $0x18] sm:$0xf]
      %v180 = vunpack.c.l.b16 %v172
      %v181 = vunpack.c.h.b16 %v172
      %v182 = vunpack.c.l.b16 %v173
      %v183 = vunpack.c.l.b16 %v174
      %v184 = vunpack.c.h.b16 %v174
      %v185 = vunpack.c.l.b16 %v175
      %v186 = vpack.c.b16 %v183, %v180
      %v187 = vpack.c.b16 %v184, %v181
      %v188 = vpack.c.b16 %v185, %v182
      %192 = vst [vmem:[#allocation2] sm:$0xff] %v186
      %193 = vst [vmem:[#allocation2 + $0x8] sm:$0xff] %v187
      %194 = vst [vmem:[#allocation2 + $0x10] sm:$0xff] %v188
      %v195 = vld [vmem:[%s165] sm:$0xff]
      %v196 = vld [vmem:[%s165 + $0x8] sm:$0xff]
      %v197 = vld [vmem:[%s165 + $0x10] sm:$0xff]
      %v198 = vld [vmem:[%s165 + $0x18] sm:$0xff]
      %v203 = vunpack.c.l.b16 %v195
      %v204 = vunpack.c.h.b16 %v195
      %v205 = vunpack.c.l.b16 %v196
      %v206 = vunpack.c.h.b16 %v196
      %v207 = vunpack.c.l.b16 %v197
      %v208 = vunpack.c.h.b16 %v197
      %v209 = vunpack.c.l.b16 %v198
      %v210 = vunpack.c.h.b16 %v198
      %v211 = vpack.c.b16 %v207, %v203
      %v212 = vpack.c.b16 %v208, %v204
      %v213 = vpack.c.b16 %v209, %v205
      %v214 = vpack.c.b16 %v210, %v206
      %215 = vrot.lane.b32.xlu0 %v211, 127
      %v216 = vpop.permute.xlu0 %215
      %217 = vrot.lane.b32.xlu0 %v212, 127
      %v218 = vpop.permute.xlu0 %217
      %219 = vrot.lane.b32.xlu0 %v213, 127
      %v220 = vpop.permute.xlu0 %219
      %221 = vrot.lane.b32.xlu0 %v214, 127
      %v222 = vpop.permute.xlu0 %221
      %vm223 = vcmask 1039360
      %v224 = vsel %vm223, %v216, %v218
      %v225 = vsel %vm223, %v218, %v220
      %v226 = vsel %vm223, %v220, %v222
      %230 = vst [vmem:[#allocation2 + $0x18] sm:$0xff] %v224
      %231 = vst [vmem:[#allocation2 + $0x20] sm:$0xff] %v225
      %232 = vst [vmem:[#allocation2 + $0x28] sm:$0xff] %v226
      %v233 = vld [vmem:[%s165] sm:$0xff]
      %v234 = vld [vmem:[%s165 + $0x8] sm:$0xff]
      %v235 = vld [vmem:[%s165 + $0x10] sm:$0xff]
      %v236 = vld [vmem:[%s165 + $0x18] sm:$0xff]
      %v241 = vunpack.c.l.b16 %v233
      %v242 = vunpack.c.h.b16 %v233
      %v243 = vunpack.c.l.b16 %v234
      %v244 = vunpack.c.h.b16 %v234
      %v245 = vunpack.c.l.b16 %v235
      %v246 = vunpack.c.h.b16 %v235
      %v247 = vunpack.c.l.b16 %v236
      %v248 = vunpack.c.h.b16 %v236
      %v249 = vpack.c.b16 %v245, %v241
      %v250 = vpack.c.b16 %v246, %v242
      %v251 = vpack.c.b16 %v247, %v243
      %v252 = vpack.c.b16 %v248, %v244
      %253 = vrot.lane.b32.xlu0 %v249, 126
      %v254 = vpop.permute.xlu0 %253
      %255 = vrot.lane.b32.xlu0 %v250, 126
      %v256 = vpop.permute.xlu0 %255
      %257 = vrot.lane.b32.xlu0 %v251, 126
      %v258 = vpop.permute.xlu0 %257
      %259 = vrot.lane.b32.xlu0 %v252, 126
      %v260 = vpop.permute.xlu0 %259
      %vm261 = vcmask 1031168
      %v262 = vsel %vm261, %v254, %v256
      %v263 = vsel %vm261, %v256, %v258
      %v264 = vsel %vm261, %v258, %v260
      %268 = vst [vmem:[#allocation2 + $0x30] sm:$0xff] %v262
      %269 = vst [vmem:[#allocation2 + $0x38] sm:$0xff] %v263
      %270 = vst [vmem:[#allocation2 + $0x40] sm:$0xff] %v264
      %v271 = vld [vmem:[%s165] sm:$0xff]
      %v272 = vld [vmem:[%s165 + $0x8] sm:$0xff]
      %v273 = vld [vmem:[%s165 + $0x10] sm:$0xff]
      %v274 = vld [vmem:[%s165 + $0x18] sm:$0xff]
      %v279 = vunpack.c.l.b16 %v271
      %v280 = vunpack.c.h.b16 %v271
      %v281 = vunpack.c.l.b16 %v272
      %v282 = vunpack.c.h.b16 %v272
      %v283 = vunpack.c.l.b16 %v273
      %v284 = vunpack.c.h.b16 %v273
      %v285 = vunpack.c.l.b16 %v274
      %v286 = vunpack.c.h.b16 %v274
      %v287 = vpack.c.b16 %v283, %v279
      %v288 = vpack.c.b16 %v284, %v280
      %v289 = vpack.c.b16 %v285, %v281
      %v290 = vpack.c.b16 %v286, %v282
      %291 = vrot.lane.b32.xlu0 %v287, 110
      %v292 = vpop.permute.xlu0 %291
      %293 = vrot.lane.b32.xlu0 %v288, 110
      %v294 = vpop.permute.xlu0 %293
      %295 = vrot.lane.b32.xlu0 %v289, 110
      %v296 = vpop.permute.xlu0 %295
      %297 = vrot.lane.b32.xlu0 %v290, 110
      %v298 = vpop.permute.xlu0 %297
      %vm299 = vcmask 900096
      %v300 = vsel %vm299, %v292, %v294
      %v301 = vsel %vm299, %v294, %v296
      %v302 = vsel %vm299, %v296, %v298
      %306 = vst [vmem:[#allocation2 + $0x48] sm:$0xff] %v300
      %307 = vst [vmem:[#allocation2 + $0x50] sm:$0xff] %v301
      %308 = vst [vmem:[#allocation2 + $0x58] sm:$0xff] %v302
      %v309 = vld [vmem:[%s165] sm:$0xff]
      %v310 = vld [vmem:[%s165 + $0x8] sm:$0xff]
      %v311 = vld [vmem:[%s165 + $0x10] sm:$0xff]
      %v312 = vld [vmem:[%s165 + $0x18] sm:$0xff]
      %v317 = vunpack.c.l.b16 %v309
      %v318 = vunpack.c.h.b16 %v309
      %v319 = vunpack.c.l.b16 %v310
      %v320 = vunpack.c.h.b16 %v310
      %v321 = vunpack.c.l.b16 %v311
      %v322 = vunpack.c.h.b16 %v311
      %v323 = vunpack.c.l.b16 %v312
      %v324 = vunpack.c.h.b16 %v312
      %v325 = vpack.c.b16 %v321, %v317
      %v326 = vpack.c.b16 %v322, %v318
      %v327 = vpack.c.b16 %v323, %v319
      %v328 = vpack.c.b16 %v324, %v320
      %329 = vrot.lane.b32.xlu0 %v325, 109
      %v330 = vpop.permute.xlu0 %329
      %331 = vrot.lane.b32.xlu0 %v326, 109
      %v332 = vpop.permute.xlu0 %331
      %333 = vrot.lane.b32.xlu0 %v327, 109
      %v334 = vpop.permute.xlu0 %333
      %335 = vrot.lane.b32.xlu0 %v328, 109
      %v336 = vpop.permute.xlu0 %335
      %vm337 = vcmask 891904
      %v338 = vsel %vm337, %v330, %v332
      %v339 = vsel %vm337, %v332, %v334
      %v340 = vsel %vm337, %v334, %v336
      %344 = vst [vmem:[#allocation2 + $0x60] sm:$0xff] %v338
      %345 = vst [vmem:[#allocation2 + $0x68] sm:$0xff] %v339
      %346 = vst [vmem:[#allocation2 + $0x70] sm:$0xff] %v340
      %v347 = vld [vmem:[%s165] sm:$0xff]
      %v348 = vld [vmem:[%s165 + $0x8] sm:$0xff]
      %v349 = vld [vmem:[%s165 + $0x10] sm:$0xff]
      %v350 = vld [vmem:[%s165 + $0x18] sm:$0xff]
      %v355 = vunpack.c.l.b16 %v347
      %v356 = vunpack.c.h.b16 %v347
      %v357 = vunpack.c.l.b16 %v348
      %v358 = vunpack.c.h.b16 %v348
      %v359 = vunpack.c.l.b16 %v349
      %v360 = vunpack.c.h.b16 %v349
      %v361 = vunpack.c.l.b16 %v350
      %v362 = vunpack.c.h.b16 %v350
      %v363 = vpack.c.b16 %v359, %v355
      %v364 = vpack.c.b16 %v360, %v356
      %v365 = vpack.c.b16 %v361, %v357
      %v366 = vpack.c.b16 %v362, %v358
      %367 = vrot.lane.b32.xlu0 %v363, 108
      %v368 = vpop.permute.xlu0 %367
      %369 = vrot.lane.b32.xlu0 %v364, 108
      %v370 = vpop.permute.xlu0 %369
      %371 = vrot.lane.b32.xlu0 %v365, 108
      %v372 = vpop.permute.xlu0 %371
      %373 = vrot.lane.b32.xlu0 %v366, 108
      %v374 = vpop.permute.xlu0 %373
      %vm375 = vcmask 883712
      %v376 = vsel %vm375, %v368, %v370
      %v377 = vsel %vm375, %v370, %v372
      %v378 = vsel %vm375, %v372, %v374
      %382 = vst [vmem:[#allocation2 + $0x78] sm:$0xff] %v376
      %383 = vst [vmem:[#allocation2 + $0x80] sm:$0xff] %v377
      %384 = vst [vmem:[#allocation2 + $0x88] sm:$0xff] %v378
      %v385 = vld [vmem:[%s165] sm:$0xff]
      %v386 = vld [vmem:[%s165 + $0x8] sm:$0xff]
      %v387 = vld [vmem:[%s165 + $0x10] sm:$0xff]
      %v388 = vld [vmem:[%s165 + $0x18] sm:$0xff]
      %v393 = vunpack.c.l.b16 %v385
      %v394 = vunpack.c.h.b16 %v385
      %v395 = vunpack.c.l.b16 %v386
      %v396 = vunpack.c.h.b16 %v386
      %v397 = vunpack.c.l.b16 %v387
      %v398 = vunpack.c.h.b16 %v387
      %v399 = vunpack.c.l.b16 %v388
      %v400 = vunpack.c.h.b16 %v388
      %v401 = vpack.c.b16 %v397, %v393
      %v402 = vpack.c.b16 %v398, %v394
      %v403 = vpack.c.b16 %v399, %v395
      %v404 = vpack.c.b16 %v400, %v396
      %405 = vrot.lane.b32.xlu0 %v401, 92
      %v406 = vpop.permute.xlu0 %405
      %407 = vrot.lane.b32.xlu0 %v402, 92
      %v408 = vpop.permute.xlu0 %407
      %409 = vrot.lane.b32.xlu0 %v403, 92
      %v410 = vpop.permute.xlu0 %409
      %411 = vrot.lane.b32.xlu0 %v404, 92
      %v412 = vpop.permute.xlu0 %411
      %vm413 = vcmask 752640
      %v414 = vsel %vm413, %v406, %v408
      %v415 = vsel %vm413, %v408, %v410
      %v416 = vsel %vm413, %v410, %v412
      %420 = vst [vmem:[#allocation2 + $0x90] sm:$0xff] %v414
      %421 = vst [vmem:[#allocation2 + $0x98] sm:$0xff] %v415
      %422 = vst [vmem:[#allocation2 + $0xa0] sm:$0xff] %v416
      %v423 = vld [vmem:[%s165] sm:$0xff]
      %v424 = vld [vmem:[%s165 + $0x8] sm:$0xff]
      %v425 = vld [vmem:[%s165 + $0x10] sm:$0xff]
      %v426 = vld [vmem:[%s165 + $0x18] sm:$0xff]
      %v431 = vunpack.c.l.b16 %v423
      %v432 = vunpack.c.h.b16 %v423
      %v433 = vunpack.c.l.b16 %v424
      %v434 = vunpack.c.h.b16 %v424
      %v435 = vunpack.c.l.b16 %v425
      %v436 = vunpack.c.h.b16 %v425
      %v437 = vunpack.c.l.b16 %v426
      %v438 = vunpack.c.h.b16 %v426
      %v439 = vpack.c.b16 %v435, %v431
      %v440 = vpack.c.b16 %v436, %v432
      %v441 = vpack.c.b16 %v437, %v433
      %v442 = vpack.c.b16 %v438, %v434
      %443 = vrot.lane.b32.xlu0 %v439, 91
      %v444 = vpop.permute.xlu0 %443
      %445 = vrot.lane.b32.xlu0 %v440, 91
      %v446 = vpop.permute.xlu0 %445
      %447 = vrot.lane.b32.xlu0 %v441, 91
      %v448 = vpop.permute.xlu0 %447
      %449 = vrot.lane.b32.xlu0 %v442, 91
      %v450 = vpop.permute.xlu0 %449
      %vm451 = vcmask 744448
      %v452 = vsel %vm451, %v444, %v446
      %v453 = vsel %vm451, %v446, %v448
      %v454 = vsel %vm451, %v448, %v450
      %458 = vst [vmem:[#allocation2 + $0xa8] sm:$0xff] %v452
      %459 = vst [vmem:[#allocation2 + $0xb0] sm:$0xff] %v453
      %460 = vst [vmem:[#allocation2 + $0xb8] sm:$0xff] %v454
      %v461 = vld [vmem:[%s165] sm:$0xff]
      %v462 = vld [vmem:[%s165 + $0x8] sm:$0xff]
      %v463 = vld [vmem:[%s165 + $0x10] sm:$0xff]
      %v464 = vld [vmem:[%s165 + $0x18] sm:$0xff]
      %v469 = vunpack.c.l.b16 %v461
      %v470 = vunpack.c.h.b16 %v461
      %v471 = vunpack.c.l.b16 %v462
      %v472 = vunpack.c.h.b16 %v462
      %v473 = vunpack.c.l.b16 %v463
      %v474 = vunpack.c.h.b16 %v463
      %v475 = vunpack.c.l.b16 %v464
      %v476 = vunpack.c.h.b16 %v464
      %v477 = vpack.c.b16 %v473, %v469
      %v478 = vpack.c.b16 %v474, %v470
      %v479 = vpack.c.b16 %v475, %v471
      %v480 = vpack.c.b16 %v476, %v472
      %481 = vrot.lane.b32.xlu0 %v477, 90
      %v482 = vpop.permute.xlu0 %481
      %483 = vrot.lane.b32.xlu0 %v478, 90
      %v484 = vpop.permute.xlu0 %483
      %485 = vrot.lane.b32.xlu0 %v479, 90
      %v486 = vpop.permute.xlu0 %485
      %487 = vrot.lane.b32.xlu0 %v480, 90
      %v488 = vpop.permute.xlu0 %487
      %vm489 = vcmask 736256
      %v490 = vsel %vm489, %v482, %v484
      %v491 = vsel %vm489, %v484, %v486
      %v492 = vsel %vm489, %v486, %v488
      %496 = vst [vmem:[#allocation2 + $0xc0] sm:$0xff] %v490
      %497 = vst [vmem:[#allocation2 + $0xc8] sm:$0xff] %v491
      %498 = vst [vmem:[#allocation2 + $0xd0] sm:$0xff] %v492
      %v499 = vld [vmem:[%s1] sm:$0xff]
      %v500 = vld [vmem:[%s1 + $0x8] sm:$0xff]
      %v501 = vld [vmem:[%s1 + $0x10] sm:$0xff]
      %v502 = vld [vmem:[%s1 + $0x18] sm:$0xff]
      %v503 = vld [vmem:[#allocation2] sm:$0xff]
      %v504 = vld [vmem:[#allocation2 + $0x8] sm:$0xff]
      %v505 = vld [vmem:[#allocation2 + $0x10] sm:$0xff]
      %v506 = vld [vmem:[#allocation2 + $0x18] sm:$0xff]
      %v507 = vld [vmem:[#allocation2 + $0x20] sm:$0xff]
      %v508 = vld [vmem:[#allocation2 + $0x28] sm:$0xff]
      %v509 = vld [vmem:[#allocation2 + $0x30] sm:$0xff]
      %v510 = vld [vmem:[#allocation2 + $0x38] sm:$0xff]
      %v511 = vld [vmem:[#allocation2 + $0x40] sm:$0xff]
      %v512 = vld [vmem:[#allocation2 + $0x48] sm:$0xff]
      %v513 = vld [vmem:[#allocation2 + $0x50] sm:$0xff]
      %v514 = vld [vmem:[#allocation2 + $0x58] sm:$0xff]
      %v515 = vld [vmem:[#allocation2 + $0x60] sm:$0xff]
      %v516 = vld [vmem:[#allocation2 + $0x68] sm:$0xff]
      %v517 = vld [vmem:[#allocation2 + $0x70] sm:$0xff]
      %v518 = vld [vmem:[#allocation2 + $0x78] sm:$0xff]
      %v519 = vld [vmem:[#allocation2 + $0x80] sm:$0xff]
      %v520 = vld [vmem:[#allocation2 + $0x88] sm:$0xff]
      %v521 = vld [vmem:[#allocation2 + $0x90] sm:$0xff]
      %v522 = vld [vmem:[#allocation2 + $0x98] sm:$0xff]
      %v523 = vld [vmem:[#allocation2 + $0xa0] sm:$0xff]
      %v524 = vld [vmem:[#allocation2 + $0xa8] sm:$0xff]
      %v525 = vld [vmem:[#allocation2 + $0xb0] sm:$0xff]
      %v526 = vld [vmem:[#allocation2 + $0xb8] sm:$0xff]
      %v527 = vld [vmem:[#allocation2 + $0xc0] sm:$0xff]
      %v528 = vld [vmem:[#allocation2 + $0xc8] sm:$0xff]
      %v529 = vld [vmem:[#allocation2 + $0xd0] sm:$0xff]
      %v530 = vld [vmem:[%s2] sm:$0xff]
      %v531 = vld [vmem:[%s2 + $0x8] sm:$0xff]
      %v532 = vld [vmem:[%s2 + $0x10] sm:$0xff]
      %v533 = vld [vmem:[%s2 + $0x18] sm:$0xff]
      %535 = vset.pattern.permute.xlu0 0
      %536 = vperm.xlu0 %535, %v530
      %v537 = vpop.permute.xlu0 %536
      %540 = vset.pattern.permute.xlu0 0
      %541 = vperm.xlu0 %540, %v531
      %v542 = vpop.permute.xlu0 %541
      %545 = vset.pattern.permute.xlu0 0
      %546 = vperm.xlu0 %545, %v532
      %v547 = vpop.permute.xlu0 %546
      %550 = vset.pattern.permute.xlu0 0
      %551 = vperm.xlu0 %550, %v533
      %v552 = vpop.permute.xlu0 %551
      %v558 = vunpack.c.l.b16 %v499
      %v559 = vunpack.c.h.b16 %v499
      %v560 = vunpack.c.l.b16 %v500
      %v561 = vunpack.c.h.b16 %v500
      %v562 = vunpack.c.l.b16 %v501
      %v563 = vunpack.c.h.b16 %v501
      %v564 = vunpack.c.l.b16 %v502
      %v565 = vunpack.c.h.b16 %v502
      %v566 = vpack.c.b16 %v560, %v558
      %v567 = vpack.c.b16 %v561, %v559
      %v568 = vpack.c.b16 %v564, %v562
      %v569 = vpack.c.b16 %v565, %v563
      %vm572 = vcmask 130048
      %v574 = vsel %vm572, %v567, 0
      %v577 = vsel %vm572, %v569, 0
      %579 = vmatprep.subr.bf16.mxu0 %v504
      %580 = vmatpush1.bf16.msra.mxu0 %v503
      %581 = vmatprep.subr.bf16.mxu0 %v507
      %582 = vmatpush1.bf16.msra.mxu0 %v506
      %583 = vmatprep.subr.bf16.mxu0 %v510
      %584 = vmatpush1.bf16.msra.mxu0 %v509
      %585 = vmatprep.subr.bf16.mxu0 %v513
      %586 = vmatpush1.bf16.msra.mxu0 %v512
      %587 = vmatprep.subr.bf16.mxu0 %v516
      %588 = vmatpush1.bf16.msra.mxu0 %v515
      %589 = vmatprep.subr.bf16.mxu0 %v519
      %590 = vmatpush1.bf16.msra.mxu0 %v518
      %591 = vmatprep.subr.bf16.mxu0 %v522
      %592 = vmatpush1.bf16.msra.mxu0 %v521
      %593 = vmatprep.subr.bf16.mxu0 %v525
      %594 = vmatpush1.bf16.msra.mxu0 %v524
      %595 = vmatprep.subr.bf16.mxu0 %v528
      %596 = vmatpush1.bf16.msra.mxu0 %v527
      %597 = vmatprep.subr.bf16.mxu0 0
      %598 = vmatpush1.bf16.msra.mxu0 0
      %599 = vmatprep.subr.bf16.mxu0 0
      %600 = vmatpush1.bf16.msra.mxu0 0
      %601 = vmatprep.subr.bf16.mxu0 0
      %602 = vmatpush1.bf16.msra.mxu0 0
      %603 = vmatprep.subr.bf16.mxu0 0
      %604 = vmatpush1.bf16.msra.mxu0 0
      %605 = vmatprep.subr.bf16.mxu0 0
      %606 = vmatpush1.bf16.msra.mxu0 0
      %607 = vmatprep.subr.bf16.mxu0 0
      %608 = vmatpush1.bf16.msra.mxu0 0
      %609 = vmatprep.subr.bf16.mxu0 0
      %610 = vmatpush1.bf16.msra.mxu0 0
      %611 = vmatprep.mubr.bf16.mxu0 %v574
      %612 = vmatmul.mubr.bf16.gmra.mrb[0].mxu0 %v566
      %v613 = vpop.f32.mrb[0].mxu0
      %v614 = vadd.f32 %v537, %v613
      %v615 = vpop.f32.mrb[0].mxu0
      %v616 = vadd.f32 %v537, %v615
      %v617 = vpop.f32.mrb[0].mxu0
      %v618 = vadd.f32 %v542, %v617
      %v619 = vpop.f32.mrb[0].mxu0
      %v620 = vadd.f32 %v542, %v619
      %621 = vmatprep.mubr.bf16.mxu0 %v577
      %622 = vmatmul.mubr.bf16.gmra.mrb[0].mxu0 %v568
      %v623 = vpop.f32.mrb[0].mxu0
      %v624 = vadd.f32 %v547, %v623
      %v625 = vpop.f32.mrb[0].mxu0
      %v626 = vadd.f32 %v547, %v625
      %v627 = vpop.f32.mrb[0].mxu0
      %v628 = vadd.f32 %v552, %v627
      %v629 = vpop.f32.mrb[0].mxu0
      %v630 = vadd.f32 %v552, %v629
      %631 = vdwg.mxu0
      %632 = vmatprep.subr.bf16.mxu0 0
      %633 = vmatpush1.bf16.msra.mxu0 %v505
      %634 = vmatprep.subr.bf16.mxu0 0
      %635 = vmatpush1.bf16.msra.mxu0 %v508
      %636 = vmatprep.subr.bf16.mxu0 0
      %637 = vmatpush1.bf16.msra.mxu0 %v511
      %638 = vmatprep.subr.bf16.mxu0 0
      %639 = vmatpush1.bf16.msra.mxu0 %v514
      %640 = vmatprep.subr.bf16.mxu0 0
      %641 = vmatpush1.bf16.msra.mxu0 %v517
      %642 = vmatprep.subr.bf16.mxu0 0
      %643 = vmatpush1.bf16.msra.mxu0 %v520
      %644 = vmatprep.subr.bf16.mxu0 0
      %645 = vmatpush1.bf16.msra.mxu0 %v523
      %646 = vmatprep.subr.bf16.mxu0 0
      %647 = vmatpush1.bf16.msra.mxu0 %v526
      %648 = vmatprep.subr.bf16.mxu0 0
      %649 = vmatpush1.bf16.msra.mxu0 %v529
      %650 = vmatprep.subr.bf16.mxu0 0
      %651 = vmatpush1.bf16.msra.mxu0 0
      %652 = vmatprep.subr.bf16.mxu0 0
      %653 = vmatpush1.bf16.msra.mxu0 0
      %654 = vmatprep.subr.bf16.mxu0 0
      %655 = vmatpush1.bf16.msra.mxu0 0
      %656 = vmatprep.subr.bf16.mxu0 0
      %657 = vmatpush1.bf16.msra.mxu0 0
      %658 = vmatprep.subr.bf16.mxu0 0
      %659 = vmatpush1.bf16.msra.mxu0 0
      %660 = vmatprep.subr.bf16.mxu0 0
      %661 = vmatpush1.bf16.msra.mxu0 0
      %662 = vmatprep.subr.bf16.mxu0 0
      %663 = vmatpush1.bf16.msra.mxu0 0
      %664 = vmatprep.mubr.bf16.mxu0 %v574
      %665 = vmatmul.mubr.bf16.gmra.mrb[0].mxu0 %v566
      %v666 = vpop.f32.mrb[0].mxu0
      %v667 = vadd.f32 %v537, %v666
      %v668 = vpop.f32.mrb[0].mxu0
      %v669 = vpop.f32.mrb[0].mxu0
      %v670 = vadd.f32 %v542, %v669
      %v671 = vpop.f32.mrb[0].mxu0
      %672 = vmatprep.mubr.bf16.mxu0 %v577
      %673 = vmatmul.mubr.bf16.gmra.mrb[0].mxu0 %v568
      %v674 = vpop.f32.mrb[0].mxu0
      %v675 = vadd.f32 %v547, %v674
      %v676 = vpop.f32.mrb[0].mxu0
      %v677 = vpop.f32.mrb[0].mxu0
      %v678 = vadd.f32 %v552, %v677
      %v679 = vpop.f32.mrb[0].mxu0
      %680 = vdwg.mxu0
      %v681 = vxor.u32 %v614, 2147483648
      %v682 = vxor.u32 %v616, 2147483648
      %v683 = vxor.u32 %v667, 2147483648
      %v684 = vxor.u32 %v618, 2147483648
      %v685 = vxor.u32 %v620, 2147483648
      %v686 = vxor.u32 %v670, 2147483648
      %v687 = vxor.u32 %v624, 2147483648
      %v688 = vxor.u32 %v626, 2147483648
      %v689 = vxor.u32 %v675, 2147483648
      %v690 = vxor.u32 %v628, 2147483648
      %v691 = vxor.u32 %v630, 2147483648
      %v692 = vxor.u32 %v678, 2147483648
      %v693 = vmul.f32 %v681, 1.442695
      %v694 = vpow.pop %v693
      %v695 = vmul.f32 %v682, 1.442695
      %v696 = vpow.pop %v695
      %v697 = vmul.f32 %v683, 1.442695
      %v698 = vpow.pop %v697
      %v699 = vmul.f32 %v684, 1.442695
      %v700 = vpow.pop %v699
      %v701 = vmul.f32 %v685, 1.442695
      %v702 = vpow.pop %v701
      %v703 = vmul.f32 %v686, 1.442695
      %v704 = vpow.pop %v703
      %v705 = vmul.f32 %v687, 1.442695
      %v706 = vpow.pop %v705
      %v707 = vmul.f32 %v688, 1.442695
      %v708 = vpow.pop %v707
      %v709 = vmul.f32 %v689, 1.442695
      %v710 = vpow.pop %v709
      %v711 = vmul.f32 %v690, 1.442695
      %v712 = vpow.pop %v711
      %v713 = vmul.f32 %v691, 1.442695
      %v714 = vpow.pop %v713
      %v715 = vmul.f32 %v692, 1.442695
      %v716 = vpow.pop %v715
      %v717 = vadd.f32 %v694, 1.0
      %v718 = vadd.f32 %v696, 1.0
      %v719 = vadd.f32 %v698, 1.0
      %v720 = vadd.f32 %v700, 1.0
      %v721 = vadd.f32 %v702, 1.0
      %v722 = vadd.f32 %v704, 1.0
      %v723 = vadd.f32 %v706, 1.0
      %v724 = vadd.f32 %v708, 1.0
      %v725 = vadd.f32 %v710, 1.0
      %v726 = vadd.f32 %v712, 1.0
      %v727 = vadd.f32 %v714, 1.0
      %v728 = vadd.f32 %v716, 1.0
      %v729 = vrcp.pop %v717
      %v730 = vmul.f32 1.0, %v729
      %v731 = vrcp.pop %v718
      %v732 = vmul.f32 1.0, %v731
      %v733 = vrcp.pop %v719
      %v734 = vmul.f32 1.0, %v733
      %v735 = vrcp.pop %v720
      %v736 = vmul.f32 1.0, %v735
      %v737 = vrcp.pop %v721
      %v738 = vmul.f32 1.0, %v737
      %v739 = vrcp.pop %v722
      %v740 = vmul.f32 1.0, %v739
      %v741 = vrcp.pop %v723
      %v742 = vmul.f32 1.0, %v741
      %v743 = vrcp.pop %v724
      %v744 = vmul.f32 1.0, %v743
      %v745 = vrcp.pop %v725
      %v746 = vmul.f32 1.0, %v745
      %v747 = vrcp.pop %v726
      %v748 = vmul.f32 1.0, %v747
      %v749 = vrcp.pop %v727
      %v750 = vmul.f32 1.0, %v749
      %v751 = vrcp.pop %v728
      %v752 = vmul.f32 1.0, %v751
      %v753 = vmul.f32 %v614, %v730
      %v754 = vmul.f32 %v616, %v732
      %v755 = vmul.f32 %v667, %v734
      %v756 = vmul.f32 %v618, %v736
      %v757 = vmul.f32 %v620, %v738
      %v758 = vmul.f32 %v670, %v740
      %v759 = vmul.f32 %v624, %v742
      %v760 = vmul.f32 %v626, %v744
      %v761 = vmul.f32 %v675, %v746
      %v762 = vmul.f32 %v628, %v748
      %v763 = vmul.f32 %v630, %v750
      %v764 = vmul.f32 %v678, %v752
      %v765 = vpack.c.bf16 %v756, %v753
      %v766 = vpack.c.bf16 %v757, %v754
      %v767 = vpack.c.bf16 %v758, %v755
      %v768 = vpack.c.bf16 %v762, %v759
      %v769 = vpack.c.bf16 %v763, %v760
      %v770 = vpack.c.bf16 %v764, %v761
      %v777 = vunpack.c.l.b16 %v765
      %v778 = vunpack.c.l.b16 %v766
      %v779 = vunpack.c.l.b16 %v767
      %v780 = vunpack.c.h.b16 %v765
      %v781 = vunpack.c.h.b16 %v766
      %v782 = vunpack.c.h.b16 %v767
      %v783 = vunpack.c.l.b16 %v768
      %v784 = vunpack.c.l.b16 %v769
      %v785 = vunpack.c.l.b16 %v770
      %v786 = vunpack.c.h.b16 %v768
      %v787 = vunpack.c.h.b16 %v769
      %v788 = vunpack.c.h.b16 %v770
      %v789 = vpack.c.b16 %v778, %v777
      %v790 = vpack.c.b16 %v779, %v779
      %v791 = vpack.c.b16 %v781, %v780
      %v792 = vpack.c.b16 %v782, %v782
      %v793 = vpack.c.b16 %v784, %v783
      %v794 = vpack.c.b16 %v785, %v785
      %v795 = vpack.c.b16 %v787, %v786
      %v796 = vpack.c.b16 %v788, %v788
      %805 = vst [vmem:[%s170] sm:$0xff] %v789
      %806 = vst [vmem:[%s170 + $0x8] sm:$0xf] %v790
      %807 = vst [vmem:[%s170 + $0xc] sm:$0xff] %v791
      %808 = vst [vmem:[%s170 + $0x14] sm:$0xf] %v792
      %809 = vst [vmem:[%s170 + $0x18] sm:$0xff] %v793
      %810 = vst [vmem:[%s170 + $0x20] sm:$0xf] %v794
      %811 = vst [vmem:[%s170 + $0x24] sm:$0xff] %v795
      %812 = vst [vmem:[%s170 + $0x2c] sm:$0xf] %v796
      %p813 = scmp.lt.s32.totalorder %s14, 1
      %s814 = scalar_select %p813, %s14, 1
      %s815 = smul.addr %s814, 12
      %s816 = smul.addr %s815, 4
      %s817 = scalar_lea.vmem %s3, %s816
      // Predicated region
      $region33: #{encoder_loss_kl.3} parent=31 // pred_check
        %p818 = pneg %p100
      $region34: #{encoder_loss_kl.3} parent=31 // pred_check_branch
        %820 = sbr.rel (%p818) target = $region36
      $region35: #{encoder_loss_kl.3} parent=31 // pred_region
        _
      $region36: #{encoder_loss_kl.3} parent=31 // pred_fallthru
        _
    $region32: #{encoder_loss_kl.3} parent=5 // pred_fallthru
      _
    %p821 = scmp.le.s32.totalorder 2, %s9
    // Predicated region
    $region37: #{encoder_loss_kl.3} parent=5 // pred_check
      %p822 = pneg %p821
    $region38: #{encoder_loss_kl.3} parent=5 // pred_check_branch
      %824 = sbr.rel (%p822) target = $region40
    $region39: #{encoder_loss_kl.3} parent=5 // pred_region
      %s825 = ssub.s32 %s9, 2
      // Predicated region
      $region41: #{encoder_loss_kl.3} parent=39 // pred_check
        %p826 = pneg %p106
      $region42: #{encoder_loss_kl.3} parent=39 // pred_check_branch
        %828 = sbr.rel (%p826) target = $region44
      $region43: #{encoder_loss_kl.3} parent=39 // pred_region
        %p829 = scmp.lt.s32.totalorder %s15, 1
        %s830 = scalar_select %p829, %s15, 1
        %s831 = smul.addr %s830, 12
        %s832 = smul.addr %s831, 4
        %s833 = scalar_lea.vmem %s3, %s832
      $region44: #{encoder_loss_kl.3} parent=39 // pred_fallthru
        _
    $region40: #{encoder_loss_kl.3} parent=5 // pred_fallthru
      _
  $region6: #{encoder_loss_kl.3} parent=0 // loop_footer
    %s13 = sadd.s32 1, %s9
  $region7: #{encoder_loss_kl.3} parent=0 // loop_footer_branch
    %8 = sbr.rel target = $region3
  $region8: #{encoder_loss_kl.3} parent=0 // loop_exit
    _

// kernel: encoder_loss_kl.4
$region0: #{encoder_loss_kl.4}
  #allocation0 [shape = 'u32[]', space=smem, size = 0x4, offset = 0x4, fixed_abs, tag = 'smem constant byte address 0x4 - core index']
  #allocation1 [shape = 'u32[144,128]{1,0:T(1,128)}', space=vmem, size = 0x12000, scoped, tag = 'internal scratch']
  #allocation2 [shape = 'bf16[288,128]{1,0:T(16,128)(2,1)}', space=vmem, size = 0x12000, scoped, tag = 'scratch operand']
  %s0 = inlined_call_operand.vmem [shape: bf16[2,4,32,138], index: 0, kind: input, shape index: {}]
  %s1 = inlined_call_operand.vmem [shape: bf16[32,288], index: 1, kind: input, shape index: {}]
  %s2 = inlined_call_operand.vmem [shape: f32[32,1], index: 2, kind: input, shape index: {}]
  %s3 = inlined_call_operand.vmem [shape: bf16[2,32,128], index: 3, kind: output, shape index: {}]
  %s4 = sld [smem:[#allocation0]]
  $region45: #{encoder_loss_kl.4} parent=0
    _
  %s6 = ssub.s32 1, %s4
  %s7 = scalar_select 0, %s6, %s4
  loop: start=0, step=1, limit=4
  $region2: #{encoder_loss_kl.4} parent=0 // loop_pre_header
    _
  $region3: #{encoder_loss_kl.4} parent=0 // loop_header
    %s9 = sphi 0, %s13
    %p10 = scmp.ge.s32.totalorder %s9, 4
    %s19 = sphi 0, %s21
    %s22 = sphi 0, %s19
    %s23 = sphi 0, %s22
    %s39 = sphi 0, %s23
    %s43 = sphi 0, %s43
    %s45 = sphi 0, %s43
    %s46 = sphi 0, %s45
    %s60 = sphi 0, %s46
    %s64 = sphi 0, %s64
    %s66 = sphi 0, %s64
    %s67 = sphi 0, %s66
    %s81 = sphi 0, %s67
    %s87 = sphi 0, %s89
    %s90 = sphi 0, %s87
    %s91 = sphi 0, %s90
    %s107 = sphi 0, %s91
  $region4: #{encoder_loss_kl.4} parent=0 // loop_header_branch
    %12 = sbr.rel (%p10) target = $region8
  $region5: #{encoder_loss_kl.4} parent=0 // loop_body
    %s14 = ssub.s32 %s9, 1
    %s15 = ssub.s32 %s9, 2
    %s16 = sadd.s32 %s9, 1
    %s17 = ssub.s32 %s9, %s16
    %p18 = scmp.eq.s32.totalorder %s17, 0
    %s20 = sadd.s32 %s19, 1
    %s21 = scalar_select %p18, %s19, %s20
    %p24 = pneg %p18
    %p25 = scmp.eq.s32.totalorder %s9, 1
    %p26 = por %p24, %p25
    %p27 = scmp.ne.s32.totalorder %s19, %s22
    %p28 = scmp.eq.s32.totalorder %s9, 0
    %p29 = por %p27, %p28
    %p30 = scmp.ne.s32.totalorder %s19, %s22
    %p31 = scmp.eq.s32.totalorder %s14, 1
    %p32 = por %p30, %p31
    %p33 = scmp.ne.s32.totalorder %s22, %s23
    %p34 = scmp.eq.s32.totalorder %s14, 0
    %p35 = por %p33, %p34
    %p36 = scmp.ne.s32.totalorder %s22, %s23
    %p37 = scmp.eq.s32.totalorder %s15, 1
    %p38 = por %p36, %p37
    %p40 = scmp.ne.s32.totalorder %s23, %s39
    %p41 = scmp.eq.s32.totalorder %s15, 0
    %p42 = por %p40, %p41
    %s44 = sadd.s32 %s43, 1
    %p47 = scmp.eq.s32.totalorder %s9, 1
    %p48 = scmp.ne.s32.totalorder %s43, %s45
    %p49 = scmp.eq.s32.totalorder %s9, 0
    %p50 = por %p48, %p49
    %p51 = scmp.ne.s32.totalorder %s43, %s45
    %p52 = scmp.eq.s32.totalorder %s14, 1
    %p53 = por %p51, %p52
    %p54 = scmp.ne.s32.totalorder %s45, %s46
    %p55 = scmp.eq.s32.totalorder %s14, 0
    %p56 = por %p54, %p55
    %p57 = scmp.ne.s32.totalorder %s45, %s46
    %p58 = scmp.eq.s32.totalorder %s15, 1
    %p59 = por %p57, %p58
    %p61 = scmp.ne.s32.totalorder %s46, %s60
    %p62 = scmp.eq.s32.totalorder %s15, 0
    %p63 = por %p61, %p62
    %s65 = sadd.s32 %s64, 1
    %p68 = scmp.eq.s32.totalorder %s9, 1
    %p69 = scmp.ne.s32.totalorder %s64, %s66
    %p70 = scmp.eq.s32.totalorder %s9, 0
    %p71 = por %p69, %p70
    %p72 = scmp.ne.s32.totalorder %s64, %s66
    %p73 = scmp.eq.s32.totalorder %s14, 1
    %p74 = por %p72, %p73
    %p75 = scmp.ne.s32.totalorder %s66, %s67
    %p76 = scmp.eq.s32.totalorder %s14, 0
    %p77 = por %p75, %p76
    %p78 = scmp.ne.s32.totalorder %s66, %s67
    %p79 = scmp.eq.s32.totalorder %s15, 1
    %p80 = por %p78, %p79
    %p82 = scmp.ne.s32.totalorder %s67, %s81
    %p83 = scmp.eq.s32.totalorder %s15, 0
    %p84 = por %p82, %p83
    %s85 = ssub.s32 %s9, %s16
    %p86 = scmp.eq.s32.totalorder %s85, 0
    %s88 = sadd.s32 %s87, 1
    %s89 = scalar_select %p86, %s87, %s88
    %p92 = pneg %p86
    %p93 = scmp.eq.s32.totalorder %s9, 1
    %p94 = por %p92, %p93
    %p95 = scmp.ne.s32.totalorder %s87, %s90
    %p96 = scmp.eq.s32.totalorder %s9, 0
    %p97 = por %p95, %p96
    %p98 = scmp.ne.s32.totalorder %s87, %s90
    %p99 = scmp.eq.s32.totalorder %s14, 1
    %p100 = por %p98, %p99
    %p101 = scmp.ne.s32.totalorder %s90, %s91
    %p102 = scmp.eq.s32.totalorder %s14, 0
    %p103 = por %p101, %p102
    %p104 = scmp.ne.s32.totalorder %s90, %s91
    %p105 = scmp.eq.s32.totalorder %s15, 1
    %p106 = por %p104, %p105
    %p108 = scmp.ne.s32.totalorder %s91, %s107
    %p109 = scmp.eq.s32.totalorder %s15, 0
    %p110 = por %p108, %p109
    %p111 = scmp.le.s32.totalorder 1, %s9
    %p112 = scmp.lt.s32.totalorder %s9, 3
    %p113 = pnand %p111, %p112
    %p114 = pneg %p113
    // Predicated region
    $region9: #{encoder_loss_kl.4} parent=5 // pred_check
      _
    $region10: #{encoder_loss_kl.4} parent=5 // pred_check_branch
      %116 = sbr.rel (%p113) target = $region12
    $region11: #{encoder_loss_kl.4} parent=5 // pred_region
      %s117 = ssub.s32 %s9, 1
      // Predicated region
      $region13: #{encoder_loss_kl.4} parent=11 // pred_check
        %p118 = pneg %p56
      $region14: #{encoder_loss_kl.4} parent=11 // pred_check_branch
        %120 = sbr.rel (%p118) target = $region16
      $region15: #{encoder_loss_kl.4} parent=11 // pred_region
        _
      $region16: #{encoder_loss_kl.4} parent=11 // pred_fallthru
        _
      // Predicated region
      $region17: #{encoder_loss_kl.4} parent=11 // pred_check
        %p121 = pneg %p77
      $region18: #{encoder_loss_kl.4} parent=11 // pred_check_branch
        %123 = sbr.rel (%p121) target = $region20
      $region19: #{encoder_loss_kl.4} parent=11 // pred_region
        _
      $region20: #{encoder_loss_kl.4} parent=11 // pred_fallthru
        _
    $region12: #{encoder_loss_kl.4} parent=5 // pred_fallthru
      _
    %p124 = scmp.lt.s32.totalorder %s9, 2
    // Predicated region
    $region21: #{encoder_loss_kl.4} parent=5 // pred_check
      %p125 = pneg %p124
    $region22: #{encoder_loss_kl.4} parent=5 // pred_check_branch
      %127 = sbr.rel (%p125) target = $region24
    $region23: #{encoder_loss_kl.4} parent=5 // pred_region
      // Predicated region
      $region25: #{encoder_loss_kl.4} parent=23 // pred_check
        %p128 = pneg %p29
      $region26: #{encoder_loss_kl.4} parent=23 // pred_check_branch
        %130 = sbr.rel (%p128) target = $region28
      $region27: #{encoder_loss_kl.4} parent=23 // pred_region
        %p131 = scmp.lt.s32.totalorder %s9, 1
        %s132 = scalar_select %p131, %s9, 1
        %s133 = smul.addr %s132, 32
        %s134 = smul.addr %s133, 4
        %s135 = scalar_lea.vmem %s0, %s134
      $region28: #{encoder_loss_kl.4} parent=23 // pred_fallthru
        _
    $region24: #{encoder_loss_kl.4} parent=5 // pred_fallthru
      _
    %p136 = scmp.le.s32.totalorder 1, %s9
    %p137 = scmp.lt.s32.totalorder %s9, 3
    %p138 = pnand %p136, %p137
    %p139 = pneg %p138
    // Predicated region
    $region29: #{encoder_loss_kl.4} parent=5 // pred_check
      _
    $region30: #{encoder_loss_kl.4} parent=5 // pred_check_branch
      %141 = sbr.rel (%p138) target = $region32
    $region31: #{encoder_loss_kl.4} parent=5 // pred_region
      %s142 = ssub.s32 %s9, 1
      %p143 = scmp.lt.s32.totalorder %s14, 1
      %s144 = scalar_select %p143, %s14, 1
      %s145 = smul.addr %s144, 32
      %s146 = smul.addr %s145, 4
      %s147 = scalar_lea.vmem %s0, %s146
      %p148 = pneg %p35
      %p149 = pneg %p32
      %p150 = pneg %p56
      %p151 = pneg %p53
      %p152 = pneg %p77
      %p153 = pneg %p74
      %p154 = pneg %p103
      %p155 = pneg %p100
      %p156 = scmp.lt.s32.totalorder %s14, 1
      %s157 = scalar_select %p156, %s14, 1
      %s158 = smul.addr %s157, 4
      %s159 = smul.addr %s158, 4
      %s160 = scalar_lea.vmem %s3, %s159
      %p161 = scmp.lt.s32.totalorder %s14, 1
      %s162 = scalar_select %p161, %s14, 1
      %s163 = smul.addr %s162, 32
      %s164 = smul.addr %s163, 4
      %s165 = scalar_lea.vmem %s0, %s164
      %p166 = scmp.lt.s32.totalorder %s14, 1
      %s167 = scalar_select %p166, %s14, 1
      %s168 = smul.addr %s167, 4
      %s169 = smul.addr %s168, 4
      %s170 = scalar_lea.vmem %s3, %s169
      %v172 = vld [vmem:[%s165] sm:$0xf]
      %v173 = vld [vmem:[%s165 + $0x8] sm:$0xf]
      %v174 = vld [vmem:[%s165 + $0x10] sm:$0xf]
      %v175 = vld [vmem:[%s165 + $0x18] sm:$0xf]
      %v180 = vunpack.c.l.b16 %v172
      %v181 = vunpack.c.l.b16 %v173
      %v182 = vunpack.c.l.b16 %v174
      %v183 = vunpack.c.l.b16 %v175
      %v184 = vpack.c.b16 %v181, %v180
      %v185 = vpack.c.b16 %v183, %v182
      %188 = vst [vmem:[#allocation2] sm:$0xff] %v184
      %189 = vst [vmem:[#allocation2 + $0x8] sm:$0xff] %v185
      %s190 = scalar_lea.vmem %s165, 32
      %v191 = vld [vmem:[%s190] sm:$0xf]
      %v192 = vld [vmem:[%s190 + $0x8] sm:$0xf]
      %v193 = vld [vmem:[%s190 + $0x10] sm:$0xf]
      %v194 = vld [vmem:[%s190 + $0x18] sm:$0xf]
      %v199 = vunpack.c.l.b16 %v191
      %v200 = vunpack.c.l.b16 %v192
      %v201 = vunpack.c.l.b16 %v193
      %v202 = vunpack.c.l.b16 %v194
      %v203 = vpack.c.b16 %v200, %v199
      %v204 = vpack.c.b16 %v202, %v201
      %207 = vst [vmem:[#allocation2 + $0x10] sm:$0xff] %v203
      %208 = vst [vmem:[#allocation2 + $0x18] sm:$0xff] %v204
      %v209 = vld [vmem:[%s165] sm:$0xff]
      %v210 = vld [vmem:[%s165 + $0x8] sm:$0xff]
      %v211 = vld [vmem:[%s165 + $0x10] sm:$0xff]
      %v212 = vld [vmem:[%s165 + $0x18] sm:$0xff]
      %v217 = vunpack.c.l.b16 %v209
      %v218 = vunpack.c.h.b16 %v209
      %v219 = vunpack.c.l.b16 %v210
      %v220 = vunpack.c.h.b16 %v210
      %v221 = vunpack.c.l.b16 %v211
      %v222 = vunpack.c.h.b16 %v211
      %v223 = vunpack.c.l.b16 %v212
      %v224 = vunpack.c.h.b16 %v212
      %v225 = vpack.c.b16 %v219, %v217
      %v226 = vpack.c.b16 %v220, %v218
      %v227 = vpack.c.b16 %v223, %v221
      %v228 = vpack.c.b16 %v224, %v222
      %229 = vrot.lane.b32.xlu0 %v225, 127
      %v230 = vpop.permute.xlu0 %229
      %231 = vrot.lane.b32.xlu0 %v226, 127
      %v232 = vpop.permute.xlu0 %231
      %233 = vrot.lane.b32.xlu0 %v227, 127
      %v234 = vpop.permute.xlu0 %233
      %235 = vrot.lane.b32.xlu0 %v228, 127
      %v236 = vpop.permute.xlu0 %235
      %vm237 = vcmask 1039360
      %v238 = vsel %vm237, %v230, %v232
      %v239 = vsel %vm237, %v234, %v236
      %242 = vst [vmem:[#allocation2 + $0x20] sm:$0xff] %v238
      %243 = vst [vmem:[#allocation2 + $0x28] sm:$0xff] %v239
      %s244 = scalar_lea.vmem %s165, 64
      %v245 = vld [vmem:[%s244] sm:$0xf]
      %v246 = vld [vmem:[%s244 + $0x8] sm:$0xf]
      %v247 = vld [vmem:[%s244 + $0x10] sm:$0xf]
      %v248 = vld [vmem:[%s244 + $0x18] sm:$0xf]
      %v253 = vunpack.c.l.b16 %v245
      %v254 = vunpack.c.l.b16 %v246
      %v255 = vunpack.c.l.b16 %v247
      %v256 = vunpack.c.l.b16 %v248
      %v257 = vpack.c.b16 %v254, %v253
      %v258 = vpack.c.b16 %v256, %v255
      %261 = vst [vmem:[#allocation2 + $0x30] sm:$0xff] %v257
      %262 = vst [vmem:[#allocation2 + $0x38] sm:$0xff] %v258
      %s263 = scalar_lea.vmem %s165, 96
      %v264 = vld [vmem:[%s263] sm:$0xf]
      %v265 = vld [vmem:[%s263 + $0x8] sm:$0xf]
      %v266 = vld [vmem:[%s263 + $0x10] sm:$0xf]
      %v267 = vld [vmem:[%s263 + $0x18] sm:$0xf]
      %v272 = vunpack.c.l.b16 %v264
      %v273 = vunpack.c.l.b16 %v265
      %v274 = vunpack.c.l.b16 %v266
      %v275 = vunpack.c.l.b16 %v267
      %v276 = vpack.c.b16 %v273, %v272
      %v277 = vpack.c.b16 %v275, %v274
      %280 = vst [vmem:[#allocation2 + $0x40] sm:$0xff] %v276
      %281 = vst [vmem:[#allocation2 + $0x48] sm:$0xff] %v277
      %v282 = vld [vmem:[%s244] sm:$0xff]
      %v283 = vld [vmem:[%s244 + $0x8] sm:$0xff]
      %v284 = vld [vmem:[%s244 + $0x10] sm:$0xff]
      %v285 = vld [vmem:[%s244 + $0x18] sm:$0xff]
      %v290 = vunpack.c.l.b16 %v282
      %v291 = vunpack.c.h.b16 %v282
      %v292 = vunpack.c.l.b16 %v283
      %v293 = vunpack.c.h.b16 %v283
      %v294 = vunpack.c.l.b16 %v284
      %v295 = vunpack.c.h.b16 %v284
      %v296 = vunpack.c.l.b16 %v285
      %v297 = vunpack.c.h.b16 %v285
      %v298 = vpack.c.b16 %v292, %v290
      %v299 = vpack.c.b16 %v293, %v291
      %v300 = vpack.c.b16 %v296, %v294
      %v301 = vpack.c.b16 %v297, %v295
      %302 = vrot.lane.b32.xlu0 %v298, 127
      %v303 = vpop.permute.xlu0 %302
      %304 = vrot.lane.b32.xlu0 %v299, 127
      %v305 = vpop.permute.xlu0 %304
      %306 = vrot.lane.b32.xlu0 %v300, 127
      %v307 = vpop.permute.xlu0 %306
      %308 = vrot.lane.b32.xlu0 %v301, 127
      %v309 = vpop.permute.xlu0 %308
      %v310 = vsel %vm237, %v303, %v305
      %v311 = vsel %vm237, %v307, %v309
      %314 = vst [vmem:[#allocation2 + $0x50] sm:$0xff] %v310
      %315 = vst [vmem:[#allocation2 + $0x58] sm:$0xff] %v311
      %v316 = vld [vmem:[%s165] sm:$0xff]
      %v317 = vld [vmem:[%s165 + $0x8] sm:$0xff]
      %v318 = vld [vmem:[%s165 + $0x10] sm:$0xff]
      %v319 = vld [vmem:[%s165 + $0x18] sm:$0xff]
      %v324 = vunpack.c.l.b16 %v316
      %v325 = vunpack.c.h.b16 %v316
      %v326 = vunpack.c.l.b16 %v317
      %v327 = vunpack.c.h.b16 %v317
      %v328 = vunpack.c.l.b16 %v318
      %v329 = vunpack.c.h.b16 %v318
      %v330 = vunpack.c.l.b16 %v319
      %v331 = vunpack.c.h.b16 %v319
      %v332 = vpack.c.b16 %v326, %v324
      %v333 = vpack.c.b16 %v327, %v325
      %v334 = vpack.c.b16 %v330, %v328
      %v335 = vpack.c.b16 %v331, %v329
      %336 = vrot.lane.b32.xlu0 %v332, 119
      %v337 = vpop.permute.xlu0 %336
      %338 = vrot.lane.b32.xlu0 %v333, 119
      %v339 = vpop.permute.xlu0 %338
      %340 = vrot.lane.b32.xlu0 %v334, 119
      %v341 = vpop.permute.xlu0 %340
      %342 = vrot.lane.b32.xlu0 %v335, 119
      %v343 = vpop.permute.xlu0 %342
      %vm344 = vcmask 973824
      %v345 = vsel %vm344, %v337, %v339
      %v346 = vsel %vm344, %v341, %v343
      %349 = vst [vmem:[#allocation2 + $0x60] sm:$0xff] %v345
      %350 = vst [vmem:[#allocation2 + $0x68] sm:$0xff] %v346
      %v351 = vld [vmem:[%s190] sm:$0xff]
      %v352 = vld [vmem:[%s190 + $0x8] sm:$0xff]
      %v353 = vld [vmem:[%s190 + $0x10] sm:$0xff]
      %v354 = vld [vmem:[%s190 + $0x18] sm:$0xff]
      %v359 = vunpack.c.l.b16 %v351
      %v360 = vunpack.c.h.b16 %v351
      %v361 = vunpack.c.l.b16 %v352
      %v362 = vunpack.c.h.b16 %v352
      %v363 = vunpack.c.l.b16 %v353
      %v364 = vunpack.c.h.b16 %v353
      %v365 = vunpack.c.l.b16 %v354
      %v366 = vunpack.c.h.b16 %v354
      %v367 = vpack.c.b16 %v361, %v359
      %v368 = vpack.c.b16 %v362, %v360
      %v369 = vpack.c.b16 %v365, %v363
      %v370 = vpack.c.b16 %v366, %v364
      %371 = vrot.lane.b32.xlu0 %v367, 119
      %v372 = vpop.permute.xlu0 %371
      %373 = vrot.lane.b32.xlu0 %v368, 119
      %v374 = vpop.permute.xlu0 %373
      %375 = vrot.lane.b32.xlu0 %v369, 119
      %v376 = vpop.permute.xlu0 %375
      %377 = vrot.lane.b32.xlu0 %v370, 119
      %v378 = vpop.permute.xlu0 %377
      %v379 = vsel %vm344, %v372, %v374
      %v380 = vsel %vm344, %v376, %v378
      %383 = vst [vmem:[#allocation2 + $0x70] sm:$0xff] %v379
      %384 = vst [vmem:[#allocation2 + $0x78] sm:$0xff] %v380
      %v385 = vld [vmem:[%s165] sm:$0xff]
      %v386 = vld [vmem:[%s165 + $0x8] sm:$0xff]
      %v387 = vld [vmem:[%s165 + $0x10] sm:$0xff]
      %v388 = vld [vmem:[%s165 + $0x18] sm:$0xff]
      %v393 = vunpack.c.l.b16 %v385
      %v394 = vunpack.c.h.b16 %v385
      %v395 = vunpack.c.l.b16 %v386
      %v396 = vunpack.c.h.b16 %v386
      %v397 = vunpack.c.l.b16 %v387
      %v398 = vunpack.c.h.b16 %v387
      %v399 = vunpack.c.l.b16 %v388
      %v400 = vunpack.c.h.b16 %v388
      %v401 = vpack.c.b16 %v395, %v393
      %v402 = vpack.c.b16 %v396, %v394
      %v403 = vpack.c.b16 %v399, %v397
      %v404 = vpack.c.b16 %v400, %v398
      %405 = vrot.lane.b32.xlu0 %v401, 118
      %v406 = vpop.permute.xlu0 %405
      %407 = vrot.lane.b32.xlu0 %v402, 118
      %v408 = vpop.permute.xlu0 %407
      %409 = vrot.lane.b32.xlu0 %v403, 118
      %v410 = vpop.permute.xlu0 %409
      %411 = vrot.lane.b32.xlu0 %v404, 118
      %v412 = vpop.permute.xlu0 %411
      %vm413 = vcmask 965632
      %v414 = vsel %vm413, %v406, %v408
      %v415 = vsel %vm413, %v410, %v412
      %418 = vst [vmem:[#allocation2 + $0x80] sm:$0xff] %v414
      %419 = vst [vmem:[#allocation2 + $0x88] sm:$0xff] %v415
      %v420 = vld [vmem:[%s1] sm:$0xff]
      %v421 = vld [vmem:[%s1 + $0x8] sm:$0xf]
      %v422 = vld [vmem:[%s1 + $0xc] sm:$0xff]
      %v423 = vld [vmem:[%s1 + $0x14] sm:$0xf]
      %v424 = vld [vmem:[%s1 + $0x18] sm:$0xff]
      %v425 = vld [vmem:[%s1 + $0x20] sm:$0xf]
      %v426 = vld [vmem:[%s1 + $0x24] sm:$0xff]
      %v427 = vld [vmem:[%s1 + $0x2c] sm:$0xf]
      %v428 = vld [vmem:[#allocation2] sm:$0xff]
      %v429 = vld [vmem:[#allocation2 + $0x8] sm:$0xff]
      %v430 = vld [vmem:[#allocation2 + $0x10] sm:$0xff]
      %v431 = vld [vmem:[#allocation2 + $0x18] sm:$0xff]
      %v432 = vld [vmem:[#allocation2 + $0x20] sm:$0xff]
      %v433 = vld [vmem:[#allocation2 + $0x28] sm:$0xff]
      %v434 = vld [vmem:[#allocation2 + $0x30] sm:$0xff]
      %v435 = vld [vmem:[#allocation2 + $0x38] sm:$0xff]
      %v436 = vld [vmem:[#allocation2 + $0x40] sm:$0xff]
      %v437 = vld [vmem:[#allocation2 + $0x48] sm:$0xff]
      %v438 = vld [vmem:[#allocation2 + $0x50] sm:$0xff]
      %v439 = vld [vmem:[#allocation2 + $0x58] sm:$0xff]
      %v440 = vld [vmem:[#allocation2 + $0x60] sm:$0xff]
      %v441 = vld [vmem:[#allocation2 + $0x68] sm:$0xff]
      %v442 = vld [vmem:[#allocation2 + $0x70] sm:$0xff]
      %v443 = vld [vmem:[#allocation2 + $0x78] sm:$0xff]
      %v444 = vld [vmem:[#allocation2 + $0x80] sm:$0xff]
      %v445 = vld [vmem:[#allocation2 + $0x88] sm:$0xff]
      %v446 = vld [vmem:[%s2] sm:$0xff]
      %v447 = vld [vmem:[%s2 + $0x8] sm:$0xff]
      %v448 = vld [vmem:[%s2 + $0x10] sm:$0xff]
      %v449 = vld [vmem:[%s2 + $0x18] sm:$0xff]
      %451 = vset.pattern.permute.xlu0 0
      %452 = vperm.xlu0 %451, %v446
      %v453 = vpop.permute.xlu0 %452
      %456 = vset.pattern.permute.xlu0 0
      %457 = vperm.xlu0 %456, %v447
      %v458 = vpop.permute.xlu0 %457
      %461 = vset.pattern.permute.xlu0 0
      %462 = vperm.xlu0 %461, %v448
      %v463 = vpop.permute.xlu0 %462
      %466 = vset.pattern.permute.xlu0 0
      %467 = vperm.xlu0 %466, %v449
      %v468 = vpop.permute.xlu0 %467
      %v478 = vunpack.c.l.b16 %v420
      %v479 = vunpack.c.h.b16 %v420
      %v480 = vunpack.c.l.b16 %v421
      %v481 = vunpack.c.l.b16 %v422
      %v482 = vunpack.c.h.b16 %v422
      %v483 = vunpack.c.l.b16 %v423
      %v484 = vunpack.c.l.b16 %v424
      %v485 = vunpack.c.h.b16 %v424
      %v486 = vunpack.c.l.b16 %v425
      %v487 = vunpack.c.l.b16 %v426
      %v488 = vunpack.c.h.b16 %v426
      %v489 = vunpack.c.l.b16 %v427
      %v490 = vpack.c.b16 %v481, %v478
      %v491 = vpack.c.b16 %v482, %v479
      %v492 = vpack.c.b16 %v483, %v480
      %v493 = vpack.c.b16 %v487, %v484
      %v494 = vpack.c.b16 %v488, %v485
      %v495 = vpack.c.b16 %v489, %v486
      %vm500 = vcmask 261120
      %v502 = vsel %vm500, %v492, 0
      %v505 = vsel %vm500, %v495, 0
      %507 = vmatprep.subr.bf16.mxu0 0
      %508 = vmatpush1.bf16.msra.mxu0 %v428
      %509 = vmatprep.subr.bf16.mxu0 0
      %510 = vmatpush1.bf16.msra.mxu0 %v429
      %511 = vmatprep.subr.bf16.mxu0 0
      %512 = vmatpush1.bf16.msra.mxu0 %v430
      %513 = vmatprep.subr.bf16.mxu0 0
      %514 = vmatpush1.bf16.msra.mxu0 %v431
      %515 = vmatprep.subr.bf16.mxu0 0
      %516 = vmatpush1.bf16.msra.mxu0 %v432
      %517 = vmatprep.subr.bf16.mxu0 0
      %518 = vmatpush1.bf16.msra.mxu0 %v433
      %519 = vmatprep.subr.bf16.mxu0 0
      %520 = vmatpush1.bf16.msra.mxu0 %v434
      %521 = vmatprep.subr.bf16.mxu0 0
      %522 = vmatpush1.bf16.msra.mxu0 %v435
      %523 = vmatprep.subr.bf16.mxu0 0
      %524 = vmatpush1.bf16.msra.mxu0 %v436
      %525 = vmatprep.subr.bf16.mxu0 0
      %526 = vmatpush1.bf16.msra.mxu0 %v437
      %527 = vmatprep.subr.bf16.mxu0 0
      %528 = vmatpush1.bf16.msra.mxu0 %v438
      %529 = vmatprep.subr.bf16.mxu0 0
      %530 = vmatpush1.bf16.msra.mxu0 %v439
      %531 = vmatprep.subr.bf16.mxu0 0
      %532 = vmatpush1.bf16.msra.mxu0 %v440
      %533 = vmatprep.subr.bf16.mxu0 0
      %534 = vmatpush1.bf16.msra.mxu0 %v441
      %535 = vmatprep.subr.bf16.mxu0 0
      %536 = vmatpush1.bf16.msra.mxu0 %v442
      %537 = vmatprep.subr.bf16.mxu0 0
      %538 = vmatpush1.bf16.msra.mxu0 %v443
      %539 = vmatprep.mubr.bf16.mxu0 %v491
      %540 = vmatmul.mubr.bf16.gmra.mrb[0].mxu0 %v490
      %v541 = vpop.f32.mrb[0].mxu0
      %v542 = vadd.f32 %v453, %v541
      %v543 = vpop.f32.mrb[0].mxu0
      %v544 = vpop.f32.mrb[0].mxu0
      %v545 = vadd.f32 %v458, %v544
      %v546 = vpop.f32.mrb[0].mxu0
      %547 = vmatprep.mubr.bf16.mxu0 %v494
      %548 = vmatmul.mubr.bf16.gmra.mrb[0].mxu0 %v493
      %v549 = vpop.f32.mrb[0].mxu0
      %v550 = vadd.f32 %v463, %v549
      %v551 = vpop.f32.mrb[0].mxu0
      %v552 = vpop.f32.mrb[0].mxu0
      %v553 = vadd.f32 %v468, %v552
      %v554 = vpop.f32.mrb[0].mxu0
      %555 = vdwg.mxu0
      %556 = vmatprep.subr.bf16.mxu0 0
      %557 = vmatpush1.bf16.msra.mxu0 %v444
      %558 = vmatprep.subr.bf16.mxu0 0
      %559 = vmatpush1.bf16.msra.mxu0 %v445
      %560 = vmatprep.subr.bf16.mxu0 0
      %561 = vmatpush1.bf16.msra.mxu0 0
      %562 = vmatprep.subr.bf16.mxu0 0
      %563 = vmatpush1.bf16.msra.mxu0 0
      %564 = vmatprep.subr.bf16.mxu0 0
      %565 = vmatpush1.bf16.msra.mxu0 0
      %566 = vmatprep.subr.bf16.mxu0 0
      %567 = vmatpush1.bf16.msra.mxu0 0
      %568 = vmatprep.subr.bf16.mxu0 0
      %569 = vmatpush1.bf16.msra.mxu0 0
      %570 = vmatprep.subr.bf16.mxu0 0
      %571 = vmatpush1.bf16.msra.mxu0 0
      %572 = vmatprep.subr.bf16.mxu0 0
      %573 = vmatpush1.bf16.msra.mxu0 0
      %574 = vmatprep.subr.bf16.mxu0 0
      %575 = vmatpush1.bf16.msra.mxu0 0
      %576 = vmatprep.subr.bf16.mxu0 0
      %577 = vmatpush1.bf16.msra.mxu0 0
      %578 = vmatprep.subr.bf16.mxu0 0
      %579 = vmatpush1.bf16.msra.mxu0 0
      %580 = vmatprep.subr.bf16.mxu0 0
      %581 = vmatpush1.bf16.msra.mxu0 0
      %582 = vmatprep.subr.bf16.mxu0 0
      %583 = vmatpush1.bf16.msra.mxu0 0
      %584 = vmatprep.subr.bf16.mxu0 0
      %585 = vmatpush1.bf16.msra.mxu0 0
      %586 = vmatprep.subr.bf16.mxu0 0
      %587 = vmatpush1.bf16.msra.mxu0 0
      %588 = vmatprep.mubr.bf16.mxu0 0
      %589 = vmatmul.mubr.bf16.gmra.mrb[0].mxu0 %v502
      %v590 = vpop.f32.mrb[0].mxu0
      %v591 = vadd.f32 %v542, %v590
      %v592 = vpop.f32.mrb[0].mxu0
      %v593 = vpop.f32.mrb[0].mxu0
      %v594 = vadd.f32 %v545, %v593
      %v595 = vpop.f32.mrb[0].mxu0
      %596 = vmatprep.mubr.bf16.mxu0 0
      %597 = vmatmul.mubr.bf16.gmra.mrb[0].mxu0 %v505
      %v598 = vpop.f32.mrb[0].mxu0
      %v599 = vadd.f32 %v550, %v598
      %v600 = vpop.f32.mrb[0].mxu0
      %v601 = vpop.f32.mrb[0].mxu0
      %v602 = vadd.f32 %v553, %v601
      %v603 = vpop.f32.mrb[0].mxu0
      %604 = vdwg.mxu0
      %v605 = vxor.u32 %v591, 2147483648
      %v606 = vxor.u32 %v594, 2147483648
      %v607 = vxor.u32 %v599, 2147483648
      %v608 = vxor.u32 %v602, 2147483648
      %v609 = vmul.f32 %v605, 1.442695
      %v610 = vpow.pop %v609
      %v611 = vmul.f32 %v606, 1.442695
      %v612 = vpow.pop %v611
      %v613 = vmul.f32 %v607, 1.442695
      %v614 = vpow.pop %v613
      %v615 = vmul.f32 %v608, 1.442695
      %v616 = vpow.pop %v615
      %v617 = vadd.f32 %v610, 1.0
      %v618 = vadd.f32 %v612, 1.0
      %v619 = vadd.f32 %v614, 1.0
      %v620 = vadd.f32 %v616, 1.0
      %v621 = vrcp.pop %v617
      %v622 = vmul.f32 1.0, %v621
      %v623 = vrcp.pop %v618
      %v624 = vmul.f32 1.0, %v623
      %v625 = vrcp.pop %v619
      %v626 = vmul.f32 1.0, %v625
      %v627 = vrcp.pop %v620
      %v628 = vmul.f32 1.0, %v627
      %v629 = vmul.f32 %v591, %v622
      %v630 = vmul.f32 %v594, %v624
      %v631 = vmul.f32 %v599, %v626
      %v632 = vmul.f32 %v602, %v628
      %v633 = vpack.c.bf16 %v630, %v629
      %v634 = vpack.c.bf16 %v632, %v631
      %v637 = vunpack.c.l.b16 %v633
      %v638 = vunpack.c.h.b16 %v633
      %v639 = vunpack.c.l.b16 %v634
      %v640 = vunpack.c.h.b16 %v634
      %v641 = vpack.c.b16 %v637, %v637
      %v642 = vpack.c.b16 %v638, %v638
      %v643 = vpack.c.b16 %v639, %v639
      %v644 = vpack.c.b16 %v640, %v640
      %649 = vst [vmem:[%s170] sm:$0xf] %v641
      %650 = vst [vmem:[%s170 + $0x4] sm:$0xf] %v642
      %651 = vst [vmem:[%s170 + $0x8] sm:$0xf] %v643
      %652 = vst [vmem:[%s170 + $0xc] sm:$0xf] %v644
      %p653 = scmp.lt.s32.totalorder %s14, 1
      %s654 = scalar_select %p653, %s14, 1
      %s655 = smul.addr %s654, 4
      %s656 = smul.addr %s655, 4
      %s657 = scalar_lea.vmem %s3, %s656
      // Predicated region
      $region33: #{encoder_loss_kl.4} parent=31 // pred_check
        %p658 = pneg %p100
      $region34: #{encoder_loss_kl.4} parent=31 // pred_check_branch
        %660 = sbr.rel (%p658) target = $region36
      $region35: #{encoder_loss_kl.4} parent=31 // pred_region
        _
      $region36: #{encoder_loss_kl.4} parent=31 // pred_fallthru
        _
    $region32: #{encoder_loss_kl.4} parent=5 // pred_fallthru
      _
    %p661 = scmp.le.s32.totalorder 2, %s9
    // Predicated region
    $region37: #{encoder_loss_kl.4} parent=5 // pred_check
      %p662 = pneg %p661
    $region38: #{encoder_loss_kl.4} parent=5 // pred_check_branch
      %664 = sbr.rel (%p662) target = $region40
    $region39: #{encoder_loss_kl.4} parent=5 // pred_region
      %s665 = ssub.s32 %s9, 2
      // Predicated region
      $region41: #{encoder_loss_kl.4} parent=39 // pred_check
        %p666 = pneg %p106
      $region42: #{encoder_loss_kl.4} parent=39 // pred_check_branch
        %668 = sbr.rel (%p666) target = $region44
      $region43: #{encoder_loss_kl.4} parent=39 // pred_region
        %p669 = scmp.lt.s32.totalorder %s15, 1
        %s670 = scalar_select %p669, %s15, 1
        %s671 = smul.addr %s670, 4
        %s672 = smul.addr %s671, 4
        %s673 = scalar_lea.vmem %s3, %s672
      $region44: #{encoder_loss_kl.4} parent=39 // pred_fallthru
        _
    $region40: #{encoder_loss_kl.4} parent=5 // pred_fallthru
      _
  $region6: #{encoder_loss_kl.4} parent=0 // loop_footer
    %s13 = sadd.s32 1, %s9
  $region7: #{encoder_loss_kl.4} parent=0 // loop_footer_branch
    %8 = sbr.rel target = $region3
  $region8: #{encoder_loss_kl.4} parent=0 // loop_exit
    _

// kernel: encoder_loss_kl.5
$region0: #{encoder_loss_kl.5}
  #allocation0 [shape = 'u32[]', space=smem, size = 0x4, offset = 0x4, fixed_abs, tag = 'smem constant byte address 0x4 - core index']
  #allocation1 [shape = 'u32[144,128]{1,0:T(1,128)}', space=vmem, size = 0x12000, scoped, tag = 'internal scratch']
  #allocation2 [shape = 'bf16[288,128]{1,0:T(16,128)(2,1)}', space=vmem, size = 0x12000, scoped, tag = 'scratch operand']
  %s0 = inlined_call_operand.vmem [shape: bf16[2,1,32,150], index: 0, kind: input, shape index: {}]
  %s1 = inlined_call_operand.vmem [shape: bf16[8,288], index: 1, kind: input, shape index: {}]
  %s2 = inlined_call_operand.vmem [shape: f32[8,1], index: 2, kind: input, shape index: {}]
  %s3 = inlined_call_operand.vmem [shape: f32[2,8,128], index: 3, kind: input, shape index: {}]
  %s4 = inlined_call_operand.vmem [shape: f32[2,1,1], index: 4, kind: output, shape index: {}]
  %s5 = sld [smem:[#allocation0]]
  $region49: #{encoder_loss_kl.5} parent=0
    _
  %s7 = ssub.s32 1, %s5
  %s8 = scalar_select 0, %s7, %s5
  loop: start=0, step=1, limit=4
  $region2: #{encoder_loss_kl.5} parent=0 // loop_pre_header
    _
  $region3: #{encoder_loss_kl.5} parent=0 // loop_header
    %s10 = sphi 0, %s14
    %p11 = scmp.ge.s32.totalorder %s10, 4
    %s20 = sphi 0, %s22
    %s23 = sphi 0, %s20
    %s24 = sphi 0, %s23
    %s40 = sphi 0, %s24
    %s44 = sphi 0, %s44
    %s46 = sphi 0, %s44
    %s47 = sphi 0, %s46
    %s61 = sphi 0, %s47
    %s65 = sphi 0, %s65
    %s67 = sphi 0, %s65
    %s68 = sphi 0, %s67
    %s82 = sphi 0, %s68
    %s88 = sphi 0, %s90
    %s91 = sphi 0, %s88
    %s92 = sphi 0, %s91
    %s108 = sphi 0, %s92
    %s114 = sphi 0, %s116
    %s117 = sphi 0, %s114
    %s118 = sphi 0, %s117
    %s134 = sphi 0, %s118
  $region4: #{encoder_loss_kl.5} parent=0 // loop_header_branch
    %13 = sbr.rel (%p11) target = $region8
  $region5: #{encoder_loss_kl.5} parent=0 // loop_body
    %s15 = ssub.s32 %s10, 1
    %s16 = ssub.s32 %s10, 2
    %s17 = sadd.s32 %s10, 1
    %s18 = ssub.s32 %s10, %s17
    %p19 = scmp.eq.s32.totalorder %s18, 0
    %s21 = sadd.s32 %s20, 1
    %s22 = scalar_select %p19, %s20, %s21
    %p25 = pneg %p19
    %p26 = scmp.eq.s32.totalorder %s10, 1
    %p27 = por %p25, %p26
    %p28 = scmp.ne.s32.totalorder %s20, %s23
    %p29 = scmp.eq.s32.totalorder %s10, 0
    %p30 = por %p28, %p29
    %p31 = scmp.ne.s32.totalorder %s20, %s23
    %p32 = scmp.eq.s32.totalorder %s15, 1
    %p33 = por %p31, %p32
    %p34 = scmp.ne.s32.totalorder %s23, %s24
    %p35 = scmp.eq.s32.totalorder %s15, 0
    %p36 = por %p34, %p35
    %p37 = scmp.ne.s32.totalorder %s23, %s24
    %p38 = scmp.eq.s32.totalorder %s16, 1
    %p39 = por %p37, %p38
    %p41 = scmp.ne.s32.totalorder %s24, %s40
    %p42 = scmp.eq.s32.totalorder %s16, 0
    %p43 = por %p41, %p42
    %s45 = sadd.s32 %s44, 1
    %p48 = scmp.eq.s32.totalorder %s10, 1
    %p49 = scmp.ne.s32.totalorder %s44, %s46
    %p50 = scmp.eq.s32.totalorder %s10, 0
    %p51 = por %p49, %p50
    %p52 = scmp.ne.s32.totalorder %s44, %s46
    %p53 = scmp.eq.s32.totalorder %s15, 1
    %p54 = por %p52, %p53
    %p55 = scmp.ne.s32.totalorder %s46, %s47
    %p56 = scmp.eq.s32.totalorder %s15, 0
    %p57 = por %p55, %p56
    %p58 = scmp.ne.s32.totalorder %s46, %s47
    %p59 = scmp.eq.s32.totalorder %s16, 1
    %p60 = por %p58, %p59
    %p62 = scmp.ne.s32.totalorder %s47, %s61
    %p63 = scmp.eq.s32.totalorder %s16, 0
    %p64 = por %p62, %p63
    %s66 = sadd.s32 %s65, 1
    %p69 = scmp.eq.s32.totalorder %s10, 1
    %p70 = scmp.ne.s32.totalorder %s65, %s67
    %p71 = scmp.eq.s32.totalorder %s10, 0
    %p72 = por %p70, %p71
    %p73 = scmp.ne.s32.totalorder %s65, %s67
    %p74 = scmp.eq.s32.totalorder %s15, 1
    %p75 = por %p73, %p74
    %p76 = scmp.ne.s32.totalorder %s67, %s68
    %p77 = scmp.eq.s32.totalorder %s15, 0
    %p78 = por %p76, %p77
    %p79 = scmp.ne.s32.totalorder %s67, %s68
    %p80 = scmp.eq.s32.totalorder %s16, 1
    %p81 = por %p79, %p80
    %p83 = scmp.ne.s32.totalorder %s68, %s82
    %p84 = scmp.eq.s32.totalorder %s16, 0
    %p85 = por %p83, %p84
    %s86 = ssub.s32 %s10, %s17
    %p87 = scmp.eq.s32.totalorder %s86, 0
    %s89 = sadd.s32 %s88, 1
    %s90 = scalar_select %p87, %s88, %s89
    %p93 = pneg %p87
    %p94 = scmp.eq.s32.totalorder %s10, 1
    %p95 = por %p93, %p94
    %p96 = scmp.ne.s32.totalorder %s88, %s91
    %p97 = scmp.eq.s32.totalorder %s10, 0
    %p98 = por %p96, %p97
    %p99 = scmp.ne.s32.totalorder %s88, %s91
    %p100 = scmp.eq.s32.totalorder %s15, 1
    %p101 = por %p99, %p100
    %p102 = scmp.ne.s32.totalorder %s91, %s92
    %p103 = scmp.eq.s32.totalorder %s15, 0
    %p104 = por %p102, %p103
    %p105 = scmp.ne.s32.totalorder %s91, %s92
    %p106 = scmp.eq.s32.totalorder %s16, 1
    %p107 = por %p105, %p106
    %p109 = scmp.ne.s32.totalorder %s92, %s108
    %p110 = scmp.eq.s32.totalorder %s16, 0
    %p111 = por %p109, %p110
    %s112 = ssub.s32 %s10, %s17
    %p113 = scmp.eq.s32.totalorder %s112, 0
    %s115 = sadd.s32 %s114, 1
    %s116 = scalar_select %p113, %s114, %s115
    %p119 = pneg %p113
    %p120 = scmp.eq.s32.totalorder %s10, 1
    %p121 = por %p119, %p120
    %p122 = scmp.ne.s32.totalorder %s114, %s117
    %p123 = scmp.eq.s32.totalorder %s10, 0
    %p124 = por %p122, %p123
    %p125 = scmp.ne.s32.totalorder %s114, %s117
    %p126 = scmp.eq.s32.totalorder %s15, 1
    %p127 = por %p125, %p126
    %p128 = scmp.ne.s32.totalorder %s117, %s118
    %p129 = scmp.eq.s32.totalorder %s15, 0
    %p130 = por %p128, %p129
    %p131 = scmp.ne.s32.totalorder %s117, %s118
    %p132 = scmp.eq.s32.totalorder %s16, 1
    %p133 = por %p131, %p132
    %p135 = scmp.ne.s32.totalorder %s118, %s134
    %p136 = scmp.eq.s32.totalorder %s16, 0
    %p137 = por %p135, %p136
    %p138 = scmp.le.s32.totalorder 1, %s10
    %p139 = scmp.lt.s32.totalorder %s10, 3
    %p140 = pnand %p138, %p139
    %p141 = pneg %p140
    // Predicated region
    $region9: #{encoder_loss_kl.5} parent=5 // pred_check
      _
    $region10: #{encoder_loss_kl.5} parent=5 // pred_check_branch
      %143 = sbr.rel (%p140) target = $region12
    $region11: #{encoder_loss_kl.5} parent=5 // pred_region
      %s144 = ssub.s32 %s10, 1
      // Predicated region
      $region13: #{encoder_loss_kl.5} parent=11 // pred_check
        %p145 = pneg %p57
      $region14: #{encoder_loss_kl.5} parent=11 // pred_check_branch
        %147 = sbr.rel (%p145) target = $region16
      $region15: #{encoder_loss_kl.5} parent=11 // pred_region
        _
      $region16: #{encoder_loss_kl.5} parent=11 // pred_fallthru
        _
      // Predicated region
      $region17: #{encoder_loss_kl.5} parent=11 // pred_check
        %p148 = pneg %p78
      $region18: #{encoder_loss_kl.5} parent=11 // pred_check_branch
        %150 = sbr.rel (%p148) target = $region20
      $region19: #{encoder_loss_kl.5} parent=11 // pred_region
        _
      $region20: #{encoder_loss_kl.5} parent=11 // pred_fallthru
        _
    $region12: #{encoder_loss_kl.5} parent=5 // pred_fallthru
      _
    %p151 = scmp.lt.s32.totalorder %s10, 2
    // Predicated region
    $region21: #{encoder_loss_kl.5} parent=5 // pred_check
      %p152 = pneg %p151
    $region22: #{encoder_loss_kl.5} parent=5 // pred_check_branch
      %154 = sbr.rel (%p152) target = $region24
    $region23: #{encoder_loss_kl.5} parent=5 // pred_region
      // Predicated region
      $region25: #{encoder_loss_kl.5} parent=23 // pred_check
        %p155 = pneg %p30
      $region26: #{encoder_loss_kl.5} parent=23 // pred_check_branch
        %157 = sbr.rel (%p155) target = $region28
      $region27: #{encoder_loss_kl.5} parent=23 // pred_region
        %p158 = scmp.lt.s32.totalorder %s10, 1
        %s159 = scalar_select %p158, %s10, 1
        %s160 = smul.addr %s159, 8
        %s161 = smul.addr %s160, 4
        %s162 = scalar_lea.vmem %s0, %s161
      $region28: #{encoder_loss_kl.5} parent=23 // pred_fallthru
        _
      // Predicated region
      $region29: #{encoder_loss_kl.5} parent=23 // pred_check
        %p163 = pneg %p98
      $region30: #{encoder_loss_kl.5} parent=23 // pred_check_branch
        %165 = sbr.rel (%p163) target = $region32
      $region31: #{encoder_loss_kl.5} parent=23 // pred_region
        %p166 = scmp.lt.s32.totalorder %s10, 1
        %s167 = scalar_select %p166, %s10, 1
        %s168 = smul.addr %s167, 8
        %s169 = scalar_lea.vmem %s3, %s168
      $region32: #{encoder_loss_kl.5} parent=23 // pred_fallthru
        _
    $region24: #{encoder_loss_kl.5} parent=5 // pred_fallthru
      _
    %p170 = scmp.le.s32.totalorder 1, %s10
    %p171 = scmp.lt.s32.totalorder %s10, 3
    %p172 = pnand %p170, %p171
    %p173 = pneg %p172
    // Predicated region
    $region33: #{encoder_loss_kl.5} parent=5 // pred_check
      _
    $region34: #{encoder_loss_kl.5} parent=5 // pred_check_branch
      %175 = sbr.rel (%p172) target = $region36
    $region35: #{encoder_loss_kl.5} parent=5 // pred_region
      %s176 = ssub.s32 %s10, 1
      %p177 = scmp.lt.s32.totalorder %s15, 1
      %s178 = scalar_select %p177, %s15, 1
      %s179 = smul.addr %s178, 8
      %s180 = smul.addr %s179, 4
      %s181 = scalar_lea.vmem %s0, %s180
      %p182 = pneg %p36
      %p183 = pneg %p33
      %p184 = pneg %p57
      %p185 = pneg %p54
      %p186 = pneg %p78
      %p187 = pneg %p75
      %p188 = scmp.lt.s32.totalorder %s15, 1
      %s189 = scalar_select %p188, %s15, 1
      %s190 = smul.addr %s189, 8
      %s191 = scalar_lea.vmem %s3, %s190
      %p192 = pneg %p104
      %p193 = pneg %p101
      %p194 = pneg %p130
      %p195 = pneg %p127
      %p196 = scmp.lt.s32.totalorder %s15, 1
      %s197 = scalar_select %p196, %s15, 1
      %s198 = scalar_lea.vmem %s4, %s197
      %p199 = scmp.lt.s32.totalorder %s15, 1
      %s200 = scalar_select %p199, %s15, 1
      %s201 = smul.addr %s200, 8
      %s202 = smul.addr %s201, 4
      %s203 = scalar_lea.vmem %s0, %s202
      %p204 = scmp.lt.s32.totalorder %s15, 1
      %s205 = scalar_select %p204, %s15, 1
      %s206 = smul.addr %s205, 8
      %s207 = scalar_lea.vmem %s3, %s206
      %p208 = scmp.lt.s32.totalorder %s15, 1
      %s209 = scalar_select %p208, %s15, 1
      %s210 = scalar_lea.vmem %s4, %s209
      %v212 = vld [vmem:[%s203] sm:$0xf]
      %v213 = vld [vmem:[%s203 + $0x8] sm:$0xf]
      %v214 = vld [vmem:[%s203 + $0x10] sm:$0xf]
      %v215 = vld [vmem:[%s203 + $0x18] sm:$0xf]
      %v220 = vunpack.c.l.b16 %v212
      %v221 = vunpack.c.l.b16 %v213
      %v222 = vunpack.c.l.b16 %v214
      %v223 = vunpack.c.l.b16 %v215
      %v224 = vpack.c.b16 %v221, %v220
      %v225 = vpack.c.b16 %v223, %v222
      %228 = vst [vmem:[#allocation2] sm:$0xff] %v224
      %229 = vst [vmem:[#allocation2 + $0x8] sm:$0xff] %v225
      %v230 = vld [vmem:[%s203] sm:$0xff]
      %v231 = vld [vmem:[%s203 + $0x8] sm:$0xff]
      %v232 = vld [vmem:[%s203 + $0x10] sm:$0xff]
      %v233 = vld [vmem:[%s203 + $0x18] sm:$0xff]
      %v238 = vunpack.c.l.b16 %v230
      %v239 = vunpack.c.h.b16 %v230
      %v240 = vunpack.c.l.b16 %v231
      %v241 = vunpack.c.h.b16 %v231
      %v242 = vunpack.c.l.b16 %v232
      %v243 = vunpack.c.h.b16 %v232
      %v244 = vunpack.c.l.b16 %v233
      %v245 = vunpack.c.h.b16 %v233
      %v246 = vpack.c.b16 %v240, %v238
      %v247 = vpack.c.b16 %v241, %v239
      %v248 = vpack.c.b16 %v244, %v242
      %v249 = vpack.c.b16 %v245, %v243
      %250 = vrot.lane.b32.xlu0 %v246, 127
      %v251 = vpop.permute.xlu0 %250
      %252 = vrot.lane.b32.xlu0 %v247, 127
      %v253 = vpop.permute.xlu0 %252
      %254 = vrot.lane.b32.xlu0 %v248, 127
      %v255 = vpop.permute.xlu0 %254
      %256 = vrot.lane.b32.xlu0 %v249, 127
      %v257 = vpop.permute.xlu0 %256
      %vm258 = vcmask 1039360
      %v259 = vsel %vm258, %v251, %v253
      %v260 = vsel %vm258, %v255, %v257
      %263 = vst [vmem:[#allocation2 + $0x10] sm:$0xff] %v259
      %264 = vst [vmem:[#allocation2 + $0x18] sm:$0xff] %v260
      %v265 = vld [vmem:[%s203] sm:$0xff]
      %v266 = vld [vmem:[%s203 + $0x8] sm:$0xff]
      %v267 = vld [vmem:[%s203 + $0x10] sm:$0xff]
      %v268 = vld [vmem:[%s203 + $0x18] sm:$0xff]
      %v273 = vunpack.c.l.b16 %v265
      %v274 = vunpack.c.h.b16 %v265
      %v275 = vunpack.c.l.b16 %v266
      %v276 = vunpack.c.h.b16 %v266
      %v277 = vunpack.c.l.b16 %v267
      %v278 = vunpack.c.h.b16 %v267
      %v279 = vunpack.c.l.b16 %v268
      %v280 = vunpack.c.h.b16 %v268
      %v281 = vpack.c.b16 %v275, %v273
      %v282 = vpack.c.b16 %v276, %v274
      %v283 = vpack.c.b16 %v279, %v277
      %v284 = vpack.c.b16 %v280, %v278
      %285 = vrot.lane.b32.xlu0 %v281, 126
      %v286 = vpop.permute.xlu0 %285
      %287 = vrot.lane.b32.xlu0 %v282, 126
      %v288 = vpop.permute.xlu0 %287
      %289 = vrot.lane.b32.xlu0 %v283, 126
      %v290 = vpop.permute.xlu0 %289
      %291 = vrot.lane.b32.xlu0 %v284, 126
      %v292 = vpop.permute.xlu0 %291
      %vm293 = vcmask 1031168
      %v294 = vsel %vm293, %v286, %v288
      %v295 = vsel %vm293, %v290, %v292
      %298 = vst [vmem:[#allocation2 + $0x20] sm:$0xff] %v294
      %299 = vst [vmem:[#allocation2 + $0x28] sm:$0xff] %v295
      %v300 = vld [vmem:[%s203] sm:$0xff]
      %v301 = vld [vmem:[%s203 + $0x8] sm:$0xff]
      %v302 = vld [vmem:[%s203 + $0x10] sm:$0xff]
      %v303 = vld [vmem:[%s203 + $0x18] sm:$0xff]
      %v308 = vunpack.c.l.b16 %v300
      %v309 = vunpack.c.h.b16 %v300
      %v310 = vunpack.c.l.b16 %v301
      %v311 = vunpack.c.h.b16 %v301
      %v312 = vunpack.c.l.b16 %v302
      %v313 = vunpack.c.h.b16 %v302
      %v314 = vunpack.c.l.b16 %v303
      %v315 = vunpack.c.h.b16 %v303
      %v316 = vpack.c.b16 %v310, %v308
      %v317 = vpack.c.b16 %v311, %v309
      %v318 = vpack.c.b16 %v314, %v312
      %v319 = vpack.c.b16 %v315, %v313
      %320 = vrot.lane.b32.xlu0 %v316, 118
      %v321 = vpop.permute.xlu0 %320
      %322 = vrot.lane.b32.xlu0 %v317, 118
      %v323 = vpop.permute.xlu0 %322
      %324 = vrot.lane.b32.xlu0 %v318, 118
      %v325 = vpop.permute.xlu0 %324
      %326 = vrot.lane.b32.xlu0 %v319, 118
      %v327 = vpop.permute.xlu0 %326
      %vm328 = vcmask 965632
      %v329 = vsel %vm328, %v321, %v323
      %v330 = vsel %vm328, %v325, %v327
      %333 = vst [vmem:[#allocation2 + $0x30] sm:$0xff] %v329
      %334 = vst [vmem:[#allocation2 + $0x38] sm:$0xff] %v330
      %v335 = vld [vmem:[%s203] sm:$0xff]
      %v336 = vld [vmem:[%s203 + $0x8] sm:$0xff]
      %v337 = vld [vmem:[%s203 + $0x10] sm:$0xff]
      %v338 = vld [vmem:[%s203 + $0x18] sm:$0xff]
      %v343 = vunpack.c.l.b16 %v335
      %v344 = vunpack.c.h.b16 %v335
      %v345 = vunpack.c.l.b16 %v336
      %v346 = vunpack.c.h.b16 %v336
      %v347 = vunpack.c.l.b16 %v337
      %v348 = vunpack.c.h.b16 %v337
      %v349 = vunpack.c.l.b16 %v338
      %v350 = vunpack.c.h.b16 %v338
      %v351 = vpack.c.b16 %v345, %v343
      %v352 = vpack.c.b16 %v346, %v344
      %v353 = vpack.c.b16 %v349, %v347
      %v354 = vpack.c.b16 %v350, %v348
      %355 = vrot.lane.b32.xlu0 %v351, 117
      %v356 = vpop.permute.xlu0 %355
      %357 = vrot.lane.b32.xlu0 %v352, 117
      %v358 = vpop.permute.xlu0 %357
      %359 = vrot.lane.b32.xlu0 %v353, 117
      %v360 = vpop.permute.xlu0 %359
      %361 = vrot.lane.b32.xlu0 %v354, 117
      %v362 = vpop.permute.xlu0 %361
      %vm363 = vcmask 957440
      %v364 = vsel %vm363, %v356, %v358
      %v365 = vsel %vm363, %v360, %v362
      %368 = vst [vmem:[#allocation2 + $0x40] sm:$0xff] %v364
      %369 = vst [vmem:[#allocation2 + $0x48] sm:$0xff] %v365
      %v370 = vld [vmem:[%s203] sm:$0xff]
      %v371 = vld [vmem:[%s203 + $0x8] sm:$0xff]
      %v372 = vld [vmem:[%s203 + $0x10] sm:$0xff]
      %v373 = vld [vmem:[%s203 + $0x18] sm:$0xff]
      %v378 = vunpack.c.l.b16 %v370
      %v379 = vunpack.c.h.b16 %v370
      %v380 = vunpack.c.l.b16 %v371
      %v381 = vunpack.c.h.b16 %v371
      %v382 = vunpack.c.l.b16 %v372
      %v383 = vunpack.c.h.b16 %v372
      %v384 = vunpack.c.l.b16 %v373
      %v385 = vunpack.c.h.b16 %v373
      %v386 = vpack.c.b16 %v380, %v378
      %v387 = vpack.c.b16 %v381, %v379
      %v388 = vpack.c.b16 %v384, %v382
      %v389 = vpack.c.b16 %v385, %v383
      %390 = vrot.lane.b32.xlu0 %v386, 116
      %v391 = vpop.permute.xlu0 %390
      %392 = vrot.lane.b32.xlu0 %v387, 116
      %v393 = vpop.permute.xlu0 %392
      %394 = vrot.lane.b32.xlu0 %v388, 116
      %v395 = vpop.permute.xlu0 %394
      %396 = vrot.lane.b32.xlu0 %v389, 116
      %v397 = vpop.permute.xlu0 %396
      %vm398 = vcmask 949248
      %v399 = vsel %vm398, %v391, %v393
      %v400 = vsel %vm398, %v395, %v397
      %403 = vst [vmem:[#allocation2 + $0x50] sm:$0xff] %v399
      %404 = vst [vmem:[#allocation2 + $0x58] sm:$0xff] %v400
      %v405 = vld [vmem:[%s203] sm:$0xff]
      %v406 = vld [vmem:[%s203 + $0x8] sm:$0xff]
      %v407 = vld [vmem:[%s203 + $0x10] sm:$0xff]
      %v408 = vld [vmem:[%s203 + $0x18] sm:$0xff]
      %v413 = vunpack.c.l.b16 %v405
      %v414 = vunpack.c.h.b16 %v405
      %v415 = vunpack.c.l.b16 %v406
      %v416 = vunpack.c.h.b16 %v406
      %v417 = vunpack.c.l.b16 %v407
      %v418 = vunpack.c.h.b16 %v407
      %v419 = vunpack.c.l.b16 %v408
      %v420 = vunpack.c.h.b16 %v408
      %v421 = vpack.c.b16 %v415, %v413
      %v422 = vpack.c.b16 %v416, %v414
      %v423 = vpack.c.b16 %v419, %v417
      %v424 = vpack.c.b16 %v420, %v418
      %425 = vrot.lane.b32.xlu0 %v421, 108
      %v426 = vpop.permute.xlu0 %425
      %427 = vrot.lane.b32.xlu0 %v422, 108
      %v428 = vpop.permute.xlu0 %427
      %429 = vrot.lane.b32.xlu0 %v423, 108
      %v430 = vpop.permute.xlu0 %429
      %431 = vrot.lane.b32.xlu0 %v424, 108
      %v432 = vpop.permute.xlu0 %431
      %vm433 = vcmask 883712
      %v434 = vsel %vm433, %v426, %v428
      %v435 = vsel %vm433, %v430, %v432
      %438 = vst [vmem:[#allocation2 + $0x60] sm:$0xff] %v434
      %439 = vst [vmem:[#allocation2 + $0x68] sm:$0xff] %v435
      %v440 = vld [vmem:[%s203] sm:$0xff]
      %v441 = vld [vmem:[%s203 + $0x8] sm:$0xff]
      %v442 = vld [vmem:[%s203 + $0x10] sm:$0xff]
      %v443 = vld [vmem:[%s203 + $0x18] sm:$0xff]
      %v448 = vunpack.c.l.b16 %v440
      %v449 = vunpack.c.h.b16 %v440
      %v450 = vunpack.c.l.b16 %v441
      %v451 = vunpack.c.h.b16 %v441
      %v452 = vunpack.c.l.b16 %v442
      %v453 = vunpack.c.h.b16 %v442
      %v454 = vunpack.c.l.b16 %v443
      %v455 = vunpack.c.h.b16 %v443
      %v456 = vpack.c.b16 %v450, %v448
      %v457 = vpack.c.b16 %v451, %v449
      %v458 = vpack.c.b16 %v454, %v452
      %v459 = vpack.c.b16 %v455, %v453
      %460 = vrot.lane.b32.xlu0 %v456, 107
      %v461 = vpop.permute.xlu0 %460
      %462 = vrot.lane.b32.xlu0 %v457, 107
      %v463 = vpop.permute.xlu0 %462
      %464 = vrot.lane.b32.xlu0 %v458, 107
      %v465 = vpop.permute.xlu0 %464
      %466 = vrot.lane.b32.xlu0 %v459, 107
      %v467 = vpop.permute.xlu0 %466
      %vm468 = vcmask 875520
      %v469 = vsel %vm468, %v461, %v463
      %v470 = vsel %vm468, %v465, %v467
      %473 = vst [vmem:[#allocation2 + $0x70] sm:$0xff] %v469
      %474 = vst [vmem:[#allocation2 + $0x78] sm:$0xff] %v470
      %v475 = vld [vmem:[%s203] sm:$0xff]
      %v476 = vld [vmem:[%s203 + $0x8] sm:$0xff]
      %v477 = vld [vmem:[%s203 + $0x10] sm:$0xff]
      %v478 = vld [vmem:[%s203 + $0x18] sm:$0xff]
      %v483 = vunpack.c.l.b16 %v475
      %v484 = vunpack.c.h.b16 %v475
      %v485 = vunpack.c.l.b16 %v476
      %v486 = vunpack.c.h.b16 %v476
      %v487 = vunpack.c.l.b16 %v477
      %v488 = vunpack.c.h.b16 %v477
      %v489 = vunpack.c.l.b16 %v478
      %v490 = vunpack.c.h.b16 %v478
      %v491 = vpack.c.b16 %v485, %v483
      %v492 = vpack.c.b16 %v486, %v484
      %v493 = vpack.c.b16 %v489, %v487
      %v494 = vpack.c.b16 %v490, %v488
      %495 = vrot.lane.b32.xlu0 %v491, 106
      %v496 = vpop.permute.xlu0 %495
      %497 = vrot.lane.b32.xlu0 %v492, 106
      %v498 = vpop.permute.xlu0 %497
      %499 = vrot.lane.b32.xlu0 %v493, 106
      %v500 = vpop.permute.xlu0 %499
      %501 = vrot.lane.b32.xlu0 %v494, 106
      %v502 = vpop.permute.xlu0 %501
      %vm503 = vcmask 867328
      %v504 = vsel %vm503, %v496, %v498
      %v505 = vsel %vm503, %v500, %v502
      %508 = vst [vmem:[#allocation2 + $0x80] sm:$0xff] %v504
      %509 = vst [vmem:[#allocation2 + $0x88] sm:$0xff] %v505
      %v510 = vld [vmem:[%s1] sm:$0xff]
      %v511 = vld [vmem:[%s1 + $0x8] sm:$0xf]
      %v512 = vld [vmem:[#allocation2] sm:$0xff]
      %v513 = vld [vmem:[#allocation2 + $0x8] sm:$0xff]
      %v514 = vld [vmem:[#allocation2 + $0x10] sm:$0xff]
      %v515 = vld [vmem:[#allocation2 + $0x18] sm:$0xff]
      %v516 = vld [vmem:[#allocation2 + $0x20] sm:$0xff]
      %v517 = vld [vmem:[#allocation2 + $0x28] sm:$0xff]
      %v518 = vld [vmem:[#allocation2 + $0x30] sm:$0xff]
      %v519 = vld [vmem:[#allocation2 + $0x38] sm:$0xff]
      %v520 = vld [vmem:[#allocation2 + $0x40] sm:$0xff]
      %v521 = vld [vmem:[#allocation2 + $0x48] sm:$0xff]
      %v522 = vld [vmem:[#allocation2 + $0x50] sm:$0xff]
      %v523 = vld [vmem:[#allocation2 + $0x58] sm:$0xff]
      %v524 = vld [vmem:[#allocation2 + $0x60] sm:$0xff]
      %v525 = vld [vmem:[#allocation2 + $0x68] sm:$0xff]
      %v526 = vld [vmem:[#allocation2 + $0x70] sm:$0xff]
      %v527 = vld [vmem:[#allocation2 + $0x78] sm:$0xff]
      %v528 = vld [vmem:[#allocation2 + $0x80] sm:$0xff]
      %v529 = vld [vmem:[#allocation2 + $0x88] sm:$0xff]
      %v530 = vld [vmem:[%s2] sm:$0xff]
      %532 = vset.pattern.permute.xlu0 0
      %533 = vperm.xlu0 %532, %v530
      %v534 = vpop.permute.xlu0 %533
      %v538 = vunpack.c.l.b16 %v510
      %v539 = vunpack.c.h.b16 %v510
      %v540 = vunpack.c.l.b16 %v511
      %v541 = vpack.c.b16 %v538, %v538
      %v542 = vpack.c.b16 %v539, %v539
      %v543 = vpack.c.b16 %v540, %v540
      %vm546 = vcmask 261120
      %v548 = vsel %vm546, %v543, 0
      %550 = vmatprep.subr.bf16.mxu0 0
      %551 = vmatpush1.bf16.msra.mxu0 %v512
      %552 = vmatprep.subr.bf16.mxu0 0
      %553 = vmatpush1.bf16.msra.mxu0 %v513
      %554 = vmatprep.subr.bf16.mxu0 0
      %555 = vmatpush1.bf16.msra.mxu0 %v514
      %556 = vmatprep.subr.bf16.mxu0 0
      %557 = vmatpush1.bf16.msra.mxu0 %v515
      %558 = vmatprep.subr.bf16.mxu0 0
      %559 = vmatpush1.bf16.msra.mxu0 %v516
      %560 = vmatprep.subr.bf16.mxu0 0
      %561 = vmatpush1.bf16.msra.mxu0 %v517
      %562 = vmatprep.subr.bf16.mxu0 0
      %563 = vmatpush1.bf16.msra.mxu0 %v518
      %564 = vmatprep.subr.bf16.mxu0 0
      %565 = vmatpush1.bf16.msra.mxu0 %v519
      %566 = vmatprep.subr.bf16.mxu0 0
      %567 = vmatpush1.bf16.msra.mxu0 %v520
      %568 = vmatprep.subr.bf16.mxu0 0
      %569 = vmatpush1.bf16.msra.mxu0 %v521
      %570 = vmatprep.subr.bf16.mxu0 0
      %571 = vmatpush1.bf16.msra.mxu0 %v522
      %572 = vmatprep.subr.bf16.mxu0 0
      %573 = vmatpush1.bf16.msra.mxu0 %v523
      %574 = vmatprep.subr.bf16.mxu0 0
      %575 = vmatpush1.bf16.msra.mxu0 %v524
      %576 = vmatprep.subr.bf16.mxu0 0
      %577 = vmatpush1.bf16.msra.mxu0 %v525
      %578 = vmatprep.subr.bf16.mxu0 0
      %579 = vmatpush1.bf16.msra.mxu0 %v526
      %580 = vmatprep.subr.bf16.mxu0 0
      %581 = vmatpush1.bf16.msra.mxu0 %v527
      %582 = vmatprep.mubr.bf16.mxu0 %v542
      %583 = vmatmul.mubr.bf16.gmra.mrb[0].mxu0 %v541
      %v584 = vpop.f32.mrb[0].mxu0
      %v585 = vadd.f32 %v534, %v584
      %v586 = vpop.f32.mrb[0].mxu0
      %v587 = vpop.f32.mrb[0].mxu0
      %v588 = vpop.f32.mrb[0].mxu0
      %589 = vdwg.mxu0
      %590 = vmatprep.subr.bf16.mxu0 0
      %591 = vmatpush1.bf16.msra.mxu0 %v528
      %592 = vmatprep.subr.bf16.mxu0 0
      %593 = vmatpush1.bf16.msra.mxu0 %v529
      %594 = vmatprep.subr.bf16.mxu0 0
      %595 = vmatpush1.bf16.msra.mxu0 0
      %596 = vmatprep.subr.bf16.mxu0 0
      %597 = vmatpush1.bf16.msra.mxu0 0
      %598 = vmatprep.subr.bf16.mxu0 0
      %599 = vmatpush1.bf16.msra.mxu0 0
      %600 = vmatprep.subr.bf16.mxu0 0
      %601 = vmatpush1.bf16.msra.mxu0 0
      %602 = vmatprep.subr.bf16.mxu0 0
      %603 = vmatpush1.bf16.msra.mxu0 0
      %604 = vmatprep.subr.bf16.mxu0 0
      %605 = vmatpush1.bf16.msra.mxu0 0
      %606 = vmatprep.subr.bf16.mxu0 0
      %607 = vmatpush1.bf16.msra.mxu0 0
      %608 = vmatprep.subr.bf16.mxu0 0
      %609 = vmatpush1.bf16.msra.mxu0 0
      %610 = vmatprep.subr.bf16.mxu0 0
      %611 = vmatpush1.bf16.msra.mxu0 0
      %612 = vmatprep.subr.bf16.mxu0 0
      %613 = vmatpush1.bf16.msra.mxu0 0
      %614 = vmatprep.subr.bf16.mxu0 0
      %615 = vmatpush1.bf16.msra.mxu0 0
      %616 = vmatprep.subr.bf16.mxu0 0
      %617 = vmatpush1.bf16.msra.mxu0 0
      %618 = vmatprep.subr.bf16.mxu0 0
      %619 = vmatpush1.bf16.msra.mxu0 0
      %620 = vmatprep.subr.bf16.mxu0 0
      %621 = vmatpush1.bf16.msra.mxu0 0
      %622 = vmatprep.mubr.bf16.mxu0 0
      %623 = vmatmul.mubr.bf16.gmra.mrb[0].mxu0 %v548
      %v624 = vpop.f32.mrb[0].mxu0
      %v625 = vadd.f32 %v585, %v624
      %v626 = vpop.f32.mrb[0].mxu0
      %v627 = vpop.f32.mrb[0].mxu0
      %v628 = vpop.f32.mrb[0].mxu0
      %629 = vdwg.mxu0
      %v630 = vmax.f32 %v625, -30.0
      %v631 = vmin.f32 %v630, 20.0
      %v632 = vld [vmem:[%s207] sm:$0xf]
      %v633 = vld [vmem:[%s207 + $0x4] sm:$0xf]
      %v634 = vmax.f32 %v633, -30.0
      %v635 = vmin.f32 %v634, 20.0
      %v636 = vsub.f32 %v632, %v625
      %v637 = vmul.f32 %v636, %v636
      %v638 = vsub.f32 0.0, %v631
      %v639 = vmul.f32 %v638, 1.442695
      %v640 = vpow.pop %v639
      %v642 = vrot.slane %v640, 4
      %v644 = vmul.f32 %v637, %v642
      %v646 = vrot.slane %v631, 4
      %v648 = vsub.f32 %v635, %v646
      %v649 = vmul.f32 %v648, 1.442695
      %v650 = vpow.pop %v649
      %v651 = vadd.f32 %v644, %v650
      %v652 = vsub.f32 %v651, 1.0
      %v653 = vsub.f32 %v652, %v635
      %v654 = vadd.f32 %v653, %v646
      %v655 = vlaneseq
      %v656 = vand.u32 %v655, 127
      %vm657 = vcmp.lt.s32.totalorder %v656, 80
      %vm658 = vcmp.lt.s32.totalorder %v656, 0
      %v659 = vsub.s32 0, %v656
      %v660 = vsel %vm658, %v659, %v656
      %v661 = vmul.u32.u64.compose %v660, 3435973837
      %v662 = vextract.low.u32 %v661
      %v663 = vextract.high.u32 %v661
      %v664 = vshrl.u32 %v663, 3
      %v665 = vmul.u32 %v664, 10
      %v666 = vsub.s32 %v660, %v665
      %v667 = vsub.s32 0, %v666
      %v668 = vsel %vm658, %v667, %v666
      %vm669 = vcmp.ne.s32.totalorder %v668, 0
      %vm670 = vcmp.lt.s32.totalorder %v668, 0
      %vm671 = vmand %vm670, %vm669
      %v672 = vadd.s32 %v668, 10
      %v673 = vsel %vm671, %v672, %v668
      %vm674 = vcmp.lt.s32.totalorder %v673, 8
      %vm675 = vmand %vm657, %vm674
      %v676 = vsel %vm675, %v654, 0.0
      %vm677 = vcmask 1043456
      %v678 = vsel %vm677, %v676, 0.0
      %679 = vadd.xlane.f32.xlu0 %v678
      %v680 = vpop.xlane.xlu0 %679
      %v681 = vrot.slane %v680, 4
      %v682 = vadd.f32 %v680, %v681
      %v683 = vrot.slane %v682, 2
      %v684 = vadd.f32 %v682, %v683
      %v685 = vrot.slane %v684, 1
      %v686 = vadd.f32 %v684, %v685
      %s687 = vtos %v686
      %v688 = vstv %s687
      %v689 = vmul.f32 %v688, 0.5
      %vm690 = vcmask 0
      %691 = vst.msk [vmem:[%s210] sm:$0x1] %vm690, %v689
      %p692 = scmp.lt.s32.totalorder %s15, 1
      %s693 = scalar_select %p692, %s15, 1
      %s694 = scalar_lea.vmem %s4, %s693
      // Predicated region
      $region37: #{encoder_loss_kl.5} parent=35 // pred_check
        %p695 = pneg %p127
      $region38: #{encoder_loss_kl.5} parent=35 // pred_check_branch
        %697 = sbr.rel (%p695) target = $region40
      $region39: #{encoder_loss_kl.5} parent=35 // pred_region
        _
      $region40: #{encoder_loss_kl.5} parent=35 // pred_fallthru
        _
    $region36: #{encoder_loss_kl.5} parent=5 // pred_fallthru
      _
    %p698 = scmp.le.s32.totalorder 2, %s10
    // Predicated region
    $region41: #{encoder_loss_kl.5} parent=5 // pred_check
      %p699 = pneg %p698
    $region42: #{encoder_loss_kl.5} parent=5 // pred_check_branch
      %701 = sbr.rel (%p699) target = $region44
    $region43: #{encoder_loss_kl.5} parent=5 // pred_region
      %s702 = ssub.s32 %s10, 2
      // Predicated region
      $region45: #{encoder_loss_kl.5} parent=43 // pred_check
        %p703 = pneg %p133
      $region46: #{encoder_loss_kl.5} parent=43 // pred_check_branch
        %705 = sbr.rel (%p703) target = $region48
      $region47: #{encoder_loss_kl.5} parent=43 // pred_region
        %p706 = scmp.lt.s32.totalorder %s16, 1
        %s707 = scalar_select %p706, %s16, 1
        %s708 = scalar_lea.vmem %s4, %s707
      $region48: #{encoder_loss_kl.5} parent=43 // pred_fallthru
        _
    $region44: #{encoder_loss_kl.5} parent=5 // pred_fallthru
      _
  $region6: #{encoder_loss_kl.5} parent=0 // loop_footer
    %s14 = sadd.s32 1, %s10
  $region7: #{encoder_loss_kl.5} parent=0 // loop_footer_branch
    %9 = sbr.rel target = $region3
  $region8: #{encoder_loss_kl.5} parent=0 // loop_exit
    _

</llo_original>
